<compile_context>
chip_gen: v7x
topology: tpu7x:2x2x1
jax: 0.10.0
libtpu: 0.0.40
codegen_flags: <defaults>
</compile_context>

<pallas_src>
import functools
import math

import jax
import jax.numpy as jnp
from jax.experimental import pallas as pl
from jax.experimental.pallas import tpu as pltpu

_LANES = 128           # lane-dense packed output
_MAX_TILE_ROWS = 4096  # 4096 x 128 x f32 = 2 MiB per output block
_MIN_TILE_ROWS = 16    # even + sublane-aligned halves
_SPLIT_ROWS = 256      # force >= 2 grid steps past this (v7x dual-TC sharding)
_FASTPATH_ROWS = 64    # <= 64 packed rows: skip Pallas, use jax.random.normal

_ON_TPU = jax.default_backend() == "tpu"


def _mix32(x):
    """murmur3-style 32-bit finalizer (uint32 in, uint32 out). Fallback only."""
    x = x ^ jnp.right_shift(x, jnp.uint32(16))
    x = x * jnp.uint32(0x7FEB352D)
    x = x ^ jnp.right_shift(x, jnp.uint32(15))
    x = x * jnp.uint32(0x846CA68B)
    x = x ^ jnp.right_shift(x, jnp.uint32(16))
    return x


def _box_muller_store(o_ref, bits1, bits2):
    """Fill o_ref from two uint32 bit streams: top half = cos branch, bottom
    half = sin branch of the same Box-Muller pairs (2 normals per pair)."""
    half = o_ref.shape[0] // 2
    one_bits = jnp.uint32(0x3F800000)
    # Exponent-OR trick: mantissa | 0x3F800000 bitcasts to [1, 2); no cvt op.
    f1 = jax.lax.bitcast_convert_type(
        jnp.right_shift(bits1, jnp.uint32(9)) | one_bits, jnp.float32)
    f2 = jax.lax.bitcast_convert_type(
        jnp.right_shift(bits2, jnp.uint32(9)) | one_bits, jnp.float32)
    u1 = jnp.float32(2.0) - f1   # (0, 1]  -> log(u1) is finite
    u2 = f2 - jnp.float32(1.0)   # [0, 1)
    # TODO(synk): jnp.log/cos/sin may lower to multi-op VPU polynomials rather
    # than single EUP pushes; if a bundle dump shows they dominate, switch to
    # an inverse-CDF rational approximation (single transcendental per normal).
    r = jnp.sqrt(jnp.float32(-2.0) * jnp.log(u1))
    theta = jnp.float32(2.0 * math.pi) * u2
    o_ref[:half, :] = r * jnp.cos(theta)
    o_ref[half:, :] = r * jnp.sin(theta)


def _randn_kernel(seed_ref, o_ref):
    """Fill o_ref (tile_rows, 128) with i.i.d. ~N(0,1) samples."""
    rows, lanes = o_ref.shape
    half = rows // 2  # multiple of 8 by construction
    if _ON_TPU:
        # Hardware PRNG: seeded per (seed, grid step) so tiles never repeat.
        pltpu.prng_seed(seed_ref[0], pl.program_id(0))
        bits1 = pltpu.bitcast(pltpu.prng_random_bits((half, lanes)), jnp.uint32)
        bits2 = pltpu.bitcast(pltpu.prng_random_bits((half, lanes)), jnp.uint32)
    else:
        # TODO(synk): software counter-hash fallback for interpret/CPU runs;
        # statistically weaker than Philox/Threefry (fine for a mock model).
        i = pl.program_id(0)
        key = seed_ref[0].astype(jnp.uint32) * jnp.uint32(0x9E3779B9)
        row = jax.lax.broadcasted_iota(jnp.int32, (half, lanes), 0)
        lane = jax.lax.broadcasted_iota(jnp.int32, (half, lanes), 1)
        ctr = (jnp.uint32(half * lanes) * i.astype(jnp.uint32)
               + (row * lanes + lane).astype(jnp.uint32))
        bits1 = _mix32(ctr ^ (key + jnp.uint32(0x243F6A88)))
        bits2 = _mix32(ctr ^ (key + jnp.uint32(0x85A308D3)))
    _box_muller_store(o_ref, bits1, bits2)


def _choose_tiling(total):
    """(padded_rows, tile_rows) for a packed (rows, 128) f32 slab."""
    rows = -(-total // _LANES)                       # ceil(total / 128)
    rows = max(_MIN_TILE_ROWS, ((rows + 15) // 16) * 16)
    # Force >= 2 "parallel" grid steps once there is enough work so v7x's two
    # TensorCores can split the grid; negligible cost on v5e/v6e (1 TC).
    min_steps = 2 if rows >= _SPLIT_ROWS else 1
    tile_rows = min(_MAX_TILE_ROWS, ((-(-rows // min_steps) + 15) // 16) * 16)
    rows = -(-rows // tile_rows) * tile_rows
    return rows, tile_rows


@functools.partial(jax.jit, static_argnums=(0,))
def _packed_slab(batch, seed_arr):
    """Lane-dense packed slab of ~N(0,1): (rows, 128) f32, rows*128 >= 3*batch."""
    rows, tile_rows = _choose_tiling(3 * batch)
    return pl.pallas_call(
        _randn_kernel,
        out_shape=jax.ShapeDtypeStruct((rows, _LANES), jnp.float32),
        grid=(rows // tile_rows,),
        in_specs=[pl.BlockSpec(memory_space=pltpu.MemorySpace.SMEM)],
        out_specs=pl.BlockSpec((tile_rows, _LANES), lambda i: (i, 0)),
        compiler_params=pltpu.CompilerParams(
            dimension_semantics=("parallel",),
            vmem_limit_bytes=64 * 1024 * 1024),
    )(seed_arr)


@functools.partial(jax.jit, static_argnums=(0,))
def _packed_randn(batch, seed_arr):
    """(batch, 3) of ~N(0,1) from the packed Pallas slab."""
    total = 3 * batch
    out_packed = _packed_slab(batch, seed_arr)
    # NOTE: out_packed is a custom-call result materialized in HBM; when
    # 3*batch != rows*128 the reshape/slice below is a separate XLA copy
    # (~12*B extra bytes read + written), not free fusion.  The kernel itself
    # writes only the minimal lane-dense ~12*B packed bytes; consumers that
    # can take the packed slab should call _packed_slab() and skip this pass.
    return out_packed.reshape(-1)[:total].reshape(batch, 3)


def init_params(key):
    # nn.Linear(10, 3): defined in __init__ but never used in forward();
    # initialized deterministically for completeness.
    kw, kb = jax.random.split(key)
    bound = 1.0 / jnp.sqrt(10.0)
    weight = jax.random.uniform(kw, (3, 10), jnp.float32, -bound, bound)
    bias = jax.random.uniform(kb, (3,), jnp.float32, -bound, bound)
    return {"output_layer": {"weight": weight, "bias": bias}}


def mock_model_forward(data, complexity, params=None, seed=0):
    """Equivalent of MockModel.forward: returns ~N(0,1) samples of shape (B, 3)."""
    del complexity  # unused in the PyTorch forward
    del params      # output_layer is never applied in the PyTorch forward
    # TODO(synk): torch.randn advances global RNG state; here the caller must
    # pass a fresh `seed` per call to get fresh samples.
    batch = int(data.shape[0])
    rows_needed = -(-3 * batch // _LANES)
    if rows_needed <= _FASTPATH_ROWS:
        # Tiny output: pallas_call fixed cost (grid setup, SMEM prefetch,
        # custom-call boundary, relayout copy) dominates -> use stock RNG.
        return jax.random.normal(jax.random.PRNGKey(seed), (batch, 3), jnp.float32)
    seed_arr = jnp.asarray([seed], dtype=jnp.int32)
    return _packed_randn(batch, seed_arr)


if __name__ == "__main__":
    key = jax.random.PRNGKey(0)
    k_param, k_data, k_cplx = jax.random.split(key, 3)
    params = init_params(k_param)

    # Small-batch example matching the test's shapes (fast path).
    batch = 2
    data = jax.random.normal(k_data, (batch, 10), dtype=jnp.float32)
    complexity = jax.random.uniform(k_cplx, (batch,), dtype=jnp.float32)
    out_small = jax.block_until_ready(
        mock_model_forward(data, complexity, params, seed=0))
    assert out_small.shape == (batch, 3), out_small.shape
    assert out_small.dtype == jnp.float32, out_small.dtype
    assert bool(jnp.all(jnp.isfinite(out_small)))

    # Larger batch: exercises the Pallas kernel path (3*4096 = 96 packed rows).
    big = 4096
    data_big = jax.random.normal(k_data, (big, 10), dtype=jnp.float32)
    complexity_big = jax.random.uniform(k_cplx, (big,), dtype=jnp.float32)
    out_big = jax.block_until_ready(
        mock_model_forward(data_big, complexity_big, params, seed=0))
    assert out_big.shape == (big, 3), out_big.shape
    assert out_big.dtype == jnp.float32, out_big.dtype
    assert bool(jnp.all(jnp.isfinite(out_big)))

    # Loose distribution sanity check on the kernel output (~N(0,1)).
    mean = float(jnp.mean(out_big))
    std = float(jnp.std(out_big))
    assert abs(mean) < 0.1, mean
    assert 0.8 < std < 1.2, std

    # Different seeds must give different samples (kernel path).
    out_big2 = jax.block_until_ready(
        mock_model_forward(data_big, complexity_big, params, seed=1))
    assert bool(jnp.any(out_big2 != out_big))

    print("KERNEL_OK")
</pallas_src>

<mosaic_0001>
module attributes {stable_mosaic.version = 11 : i64} {
  func.func @_randn_kernel(%arg0: i32, %arg1: memref<1xi32, #tpu.memory_space<smem>>, %arg2: memref<96x128xf32, #tpu.memory_space<vmem>>) attributes {dimension_semantics = [#tpu.dimension_semantics<parallel>], iteration_bounds = array<i64: 1>, scalar_prefetch = 0 : i64, scratch_operands = 0 : i64, tpu.core_type = #tpu.core_type<tc>, window_params = [{transform_indices = @transform_0, window_bounds = array<i64: 1>}, {transform_indices = @transform_1, window_bounds = array<i64: 96, 128>}]} {
    %c0 = arith.constant 0 : index
    %0 = memref.load %arg1[%c0] : memref<1xi32, #tpu.memory_space<smem>>
    %c-1640531527_i32 = arith.constant -1640531527 : i32
    %1 = arith.muli %0, %c-1640531527_i32 : i32
    %2 = tpu.iota {dimensions = array<i32: 0>} : vector<48x128xi32>
    %3 = tpu.iota {dimensions = array<i32: 1>} : vector<48x128xi32>
    %c6144_i32 = arith.constant 6144 : i32
    %4 = arith.muli %c6144_i32, %arg0 : i32
    %c128_i32 = arith.constant 128 : i32
    %5 = vector.broadcast %c128_i32 : i32 to vector<48x128xi32>
    %6 = arith.muli %2, %5 : vector<48x128xi32>
    %7 = arith.addi %6, %3 : vector<48x128xi32>
    %8 = vector.broadcast %4 : i32 to vector<48x128xi32>
    %9 = arith.addi %8, %7 : vector<48x128xi32>
    %c608135816_i32 = arith.constant 608135816 : i32
    %10 = arith.addi %1, %c608135816_i32 : i32
    %11 = vector.broadcast %10 : i32 to vector<48x128xi32>
    %12 = arith.xori %9, %11 : vector<48x128xi32>
    %c16_i32 = arith.constant 16 : i32
    %13 = vector.broadcast %c16_i32 : i32 to vector<48x128xi32>
    %14 = arith.shrui %12, %13 : vector<48x128xi32>
    %15 = arith.xori %12, %14 : vector<48x128xi32>
    %c2146121005_i32 = arith.constant 2146121005 : i32
    %16 = vector.broadcast %c2146121005_i32 : i32 to vector<48x128xi32>
    %17 = arith.muli %15, %16 : vector<48x128xi32>
    %c15_i32 = arith.constant 15 : i32
    %18 = vector.broadcast %c15_i32 : i32 to vector<48x128xi32>
    %19 = arith.shrui %17, %18 : vector<48x128xi32>
    %20 = arith.xori %17, %19 : vector<48x128xi32>
    %c-2073254261_i32 = arith.constant -2073254261 : i32
    %21 = vector.broadcast %c-2073254261_i32 : i32 to vector<48x128xi32>
    %22 = arith.muli %20, %21 : vector<48x128xi32>
    %c16_i32_0 = arith.constant 16 : i32
    %23 = vector.broadcast %c16_i32_0 : i32 to vector<48x128xi32>
    %24 = arith.shrui %22, %23 : vector<48x128xi32>
    %25 = arith.xori %22, %24 : vector<48x128xi32>
    %c-2052912941_i32 = arith.constant -2052912941 : i32
    %26 = arith.addi %1, %c-2052912941_i32 : i32
    %27 = vector.broadcast %26 : i32 to vector<48x128xi32>
    %28 = arith.xori %9, %27 : vector<48x128xi32>
    %c16_i32_1 = arith.constant 16 : i32
    %29 = vector.broadcast %c16_i32_1 : i32 to vector<48x128xi32>
    %30 = arith.shrui %28, %29 : vector<48x128xi32>
    %31 = arith.xori %28, %30 : vector<48x128xi32>
    %c2146121005_i32_2 = arith.constant 2146121005 : i32
    %32 = vector.broadcast %c2146121005_i32_2 : i32 to vector<48x128xi32>
    %33 = arith.muli %31, %32 : vector<48x128xi32>
    %c15_i32_3 = arith.constant 15 : i32
    %34 = vector.broadcast %c15_i32_3 : i32 to vector<48x128xi32>
    %35 = arith.shrui %33, %34 : vector<48x128xi32>
    %36 = arith.xori %33, %35 : vector<48x128xi32>
    %c-2073254261_i32_4 = arith.constant -2073254261 : i32
    %37 = vector.broadcast %c-2073254261_i32_4 : i32 to vector<48x128xi32>
    %38 = arith.muli %36, %37 : vector<48x128xi32>
    %c16_i32_5 = arith.constant 16 : i32
    %39 = vector.broadcast %c16_i32_5 : i32 to vector<48x128xi32>
    %40 = arith.shrui %38, %39 : vector<48x128xi32>
    %41 = arith.xori %38, %40 : vector<48x128xi32>
    %c9_i32 = arith.constant 9 : i32
    %42 = vector.broadcast %c9_i32 : i32 to vector<48x128xi32>
    %43 = arith.shrui %25, %42 : vector<48x128xi32>
    %c1065353216_i32 = arith.constant 1065353216 : i32
    %44 = vector.broadcast %c1065353216_i32 : i32 to vector<48x128xi32>
    %45 = arith.ori %43, %44 : vector<48x128xi32>
    %46 = tpu.bitcast %45 : vector<48x128xi32> -> vector<48x128xf32>
    %c9_i32_6 = arith.constant 9 : i32
    %47 = vector.broadcast %c9_i32_6 : i32 to vector<48x128xi32>
    %48 = arith.shrui %41, %47 : vector<48x128xi32>
    %c1065353216_i32_7 = arith.constant 1065353216 : i32
    %49 = vector.broadcast %c1065353216_i32_7 : i32 to vector<48x128xi32>
    %50 = arith.ori %48, %49 : vector<48x128xi32>
    %51 = tpu.bitcast %50 : vector<48x128xi32> -> vector<48x128xf32>
    %cst = arith.constant 2.000000e+00 : f32
    %52 = vector.broadcast %cst : f32 to vector<48x128xf32>
    %53 = arith.subf %52, %46 : vector<48x128xf32>
    %cst_8 = arith.constant 1.000000e+00 : f32
    %54 = vector.broadcast %cst_8 : f32 to vector<48x128xf32>
    %55 = arith.subf %51, %54 : vector<48x128xf32>
    %56 = math.log %53 : vector<48x128xf32>
    %cst_9 = arith.constant -2.000000e+00 : f32
    %57 = vector.broadcast %cst_9 : f32 to vector<48x128xf32>
    %58 = arith.mulf %57, %56 : vector<48x128xf32>
    %59 = math.sqrt %58 : vector<48x128xf32>
    %cst_10 = arith.constant 6.28318548 : f32
    %60 = vector.broadcast %cst_10 : f32 to vector<48x128xf32>
    %61 = arith.mulf %60, %55 : vector<48x128xf32>
    %62 = math.cos %61 : vector<48x128xf32>
    %63 = arith.mulf %59, %62 : vector<48x128xf32>
    %c0_11 = arith.constant 0 : index
    %c0_12 = arith.constant 0 : index
    %64 = vector.load %arg2[%c0_11, %c0_12] : memref<96x128xf32, #tpu.memory_space<vmem>>, vector<48x128xf32>
    tpu.vector_store %arg2[%c0_11, %c0_12], %63 {strides = array<i32>} : memref<96x128xf32, #tpu.memory_space<vmem>>, vector<48x128xf32>,
    %65 = math.sin %61 : vector<48x128xf32>
    %66 = arith.mulf %59, %65 : vector<48x128xf32>
    %c48 = arith.constant 48 : index
    %c0_13 = arith.constant 0 : index
    %67 = vector.load %arg2[%c48, %c0_13] : memref<96x128xf32, #tpu.memory_space<vmem>>, vector<48x128xf32>
    tpu.vector_store %arg2[%c48, %c0_13], %66 {strides = array<i32>} : memref<96x128xf32, #tpu.memory_space<vmem>>, vector<48x128xf32>,
    return
  }
  func.func @transform_0(%arg0: i32) -> i32 {
    %c0_i32 = arith.constant 0 : i32
    %c0_i32_0 = arith.constant 0 : i32
    return %c0_i32 : i32
  }
  func.func @transform_1(%arg0: i32) -> (i32, i32) {
    %c0_i32 = arith.constant 0 : i32
    %c0_i32_0 = arith.constant 0 : i32
    return %arg0, %c0_i32 : i32, i32
  }
}

</mosaic_0001>

<llo_original>
// kernel: _packed_slab.1
$region0: #{_packed_slab.1}
  #allocation0 [shape = 'u32[]', space=smem, size = 0x4, offset = 0x4, fixed_abs, tag = 'smem constant byte address 0x4 - core index']
  #allocation1 [shape = 'u32[144,128]{1,0:T(1,128)}', space=vmem, size = 0x12000, scoped, tag = 'internal scratch']
  #allocation2 [shape = 's32[1]{0:T(128)S(6)}', space=smem, size = 0x200, scoped, tag = 'scoped memory for _packed_slab.1']
  %s0 = inlined_call_operand.<no memory space> [shape: s32[1], index: 0, kind: input, shape index: {}]
  %s1 = inlined_call_operand.hbm [shape: f32[96,128], index: 1, kind: output, shape index: {}]
  %s2 = sld [smem:[#allocation0]]
  $region14: #{_packed_slab.1} parent=0
    _
  %s4 = ssub.s32 1, %s2
  %s5 = scalar_select 0, %s4, %s2
  %6 = sst [smem:[#allocation2]] %s0
  $region1: #{_packed_slab.1} parent=0
    #allocation3 [shape = 'u8[49152]{0}', space=vmem, size = 0xc000, scoped, tag = 'output window, operand 0, single buffered']
    #allocation4 [shape = 's32[1]{0}', space=sflag, size = 0x4, scoped, tag = 'scoped memory for _packed_slab.1']
    %7 = vsyncpa [#allocation4], 0
    // Predicated region
    $region2: #{_packed_slab.1} parent=1 // pred_check
      _
    $region3: #{_packed_slab.1} parent=1 // pred_check_branch
      %9 = sbr.rel (0) target = $region5
    $region4: #{_packed_slab.1} parent=1 // pred_region
      _
    $region5: #{_packed_slab.1} parent=1 // pred_fallthru
      _
    %s10 = sld [smem:[#allocation2]]
    %s11 = smul.u32 %s10, 2654435769
    %v12 = vlaneseq
    %v13 = vshrl.u32 %v12, 7
    %v14 = vadd.s32 %v13, 8
    %v15 = vadd.s32 %v13, 16
    %v16 = vadd.s32 %v13, 24
    %v17 = vadd.s32 %v13, 32
    %v18 = vadd.s32 %v13, 40
    %v19 = vlaneseq
    %v20 = vand.u32 %v19, 127
    %s21 = smul.u32 0, 6144
    %v22 = vmul.u32 %v13, 128
    %v23 = vmul.u32 %v14, 128
    %v24 = vmul.u32 %v15, 128
    %v25 = vmul.u32 %v16, 128
    %v26 = vmul.u32 %v17, 128
    %v27 = vmul.u32 %v18, 128
    %v28 = vadd.s32 %v22, %v20
    %v29 = vadd.s32 %v23, %v20
    %v30 = vadd.s32 %v24, %v20
    %v31 = vadd.s32 %v25, %v20
    %v32 = vadd.s32 %v26, %v20
    %v33 = vadd.s32 %v27, %v20
    %v34 = vstv %s21
    %v35 = vadd.s32 %v34, %v28
    %v36 = vadd.s32 %v34, %v29
    %v37 = vadd.s32 %v34, %v30
    %v38 = vadd.s32 %v34, %v31
    %v39 = vadd.s32 %v34, %v32
    %v40 = vadd.s32 %v34, %v33
    %s41 = sadd.s32 %s11, 608135816
    %v42 = vstv %s41
    %v43 = vxor.u32 %v35, %v42
    %v44 = vxor.u32 %v36, %v42
    %v45 = vxor.u32 %v37, %v42
    %v46 = vxor.u32 %v38, %v42
    %v47 = vxor.u32 %v39, %v42
    %v48 = vxor.u32 %v40, %v42
    %v49 = vshrl.u32 %v43, 16
    %v50 = vshrl.u32 %v44, 16
    %v51 = vshrl.u32 %v45, 16
    %v52 = vshrl.u32 %v46, 16
    %v53 = vshrl.u32 %v47, 16
    %v54 = vshrl.u32 %v48, 16
    %v55 = vxor.u32 %v43, %v49
    %v56 = vxor.u32 %v44, %v50
    %v57 = vxor.u32 %v45, %v51
    %v58 = vxor.u32 %v46, %v52
    %v59 = vxor.u32 %v47, %v53
    %v60 = vxor.u32 %v48, %v54
    %v61 = vmul.u32 %v55, 2146121005
    %v62 = vmul.u32 %v56, 2146121005
    %v63 = vmul.u32 %v57, 2146121005
    %v64 = vmul.u32 %v58, 2146121005
    %v65 = vmul.u32 %v59, 2146121005
    %v66 = vmul.u32 %v60, 2146121005
    %v67 = vshrl.u32 %v61, 15
    %v68 = vshrl.u32 %v62, 15
    %v69 = vshrl.u32 %v63, 15
    %v70 = vshrl.u32 %v64, 15
    %v71 = vshrl.u32 %v65, 15
    %v72 = vshrl.u32 %v66, 15
    %v73 = vxor.u32 %v61, %v67
    %v74 = vxor.u32 %v62, %v68
    %v75 = vxor.u32 %v63, %v69
    %v76 = vxor.u32 %v64, %v70
    %v77 = vxor.u32 %v65, %v71
    %v78 = vxor.u32 %v66, %v72
    %v79 = vmul.u32 %v73, 2221713035
    %v80 = vmul.u32 %v74, 2221713035
    %v81 = vmul.u32 %v75, 2221713035
    %v82 = vmul.u32 %v76, 2221713035
    %v83 = vmul.u32 %v77, 2221713035
    %v84 = vmul.u32 %v78, 2221713035
    %v85 = vshrl.u32 %v79, 16
    %v86 = vshrl.u32 %v80, 16
    %v87 = vshrl.u32 %v81, 16
    %v88 = vshrl.u32 %v82, 16
    %v89 = vshrl.u32 %v83, 16
    %v90 = vshrl.u32 %v84, 16
    %v91 = vxor.u32 %v79, %v85
    %v92 = vxor.u32 %v80, %v86
    %v93 = vxor.u32 %v81, %v87
    %v94 = vxor.u32 %v82, %v88
    %v95 = vxor.u32 %v83, %v89
    %v96 = vxor.u32 %v84, %v90
    %s97 = sadd.s32 %s11, 2242054355
    %v98 = vstv %s97
    %v99 = vxor.u32 %v35, %v98
    %v100 = vxor.u32 %v36, %v98
    %v101 = vxor.u32 %v37, %v98
    %v102 = vxor.u32 %v38, %v98
    %v103 = vxor.u32 %v39, %v98
    %v104 = vxor.u32 %v40, %v98
    %v105 = vshrl.u32 %v99, 16
    %v106 = vshrl.u32 %v100, 16
    %v107 = vshrl.u32 %v101, 16
    %v108 = vshrl.u32 %v102, 16
    %v109 = vshrl.u32 %v103, 16
    %v110 = vshrl.u32 %v104, 16
    %v111 = vxor.u32 %v99, %v105
    %v112 = vxor.u32 %v100, %v106
    %v113 = vxor.u32 %v101, %v107
    %v114 = vxor.u32 %v102, %v108
    %v115 = vxor.u32 %v103, %v109
    %v116 = vxor.u32 %v104, %v110
    %v117 = vmul.u32 %v111, 2146121005
    %v118 = vmul.u32 %v112, 2146121005
    %v119 = vmul.u32 %v113, 2146121005
    %v120 = vmul.u32 %v114, 2146121005
    %v121 = vmul.u32 %v115, 2146121005
    %v122 = vmul.u32 %v116, 2146121005
    %v123 = vshrl.u32 %v117, 15
    %v124 = vshrl.u32 %v118, 15
    %v125 = vshrl.u32 %v119, 15
    %v126 = vshrl.u32 %v120, 15
    %v127 = vshrl.u32 %v121, 15
    %v128 = vshrl.u32 %v122, 15
    %v129 = vxor.u32 %v117, %v123
    %v130 = vxor.u32 %v118, %v124
    %v131 = vxor.u32 %v119, %v125
    %v132 = vxor.u32 %v120, %v126
    %v133 = vxor.u32 %v121, %v127
    %v134 = vxor.u32 %v122, %v128
    %v135 = vmul.u32 %v129, 2221713035
    %v136 = vmul.u32 %v130, 2221713035
    %v137 = vmul.u32 %v131, 2221713035
    %v138 = vmul.u32 %v132, 2221713035
    %v139 = vmul.u32 %v133, 2221713035
    %v140 = vmul.u32 %v134, 2221713035
    %v141 = vshrl.u32 %v135, 16
    %v142 = vshrl.u32 %v136, 16
    %v143 = vshrl.u32 %v137, 16
    %v144 = vshrl.u32 %v138, 16
    %v145 = vshrl.u32 %v139, 16
    %v146 = vshrl.u32 %v140, 16
    %v147 = vxor.u32 %v135, %v141
    %v148 = vxor.u32 %v136, %v142
    %v149 = vxor.u32 %v137, %v143
    %v150 = vxor.u32 %v138, %v144
    %v151 = vxor.u32 %v139, %v145
    %v152 = vxor.u32 %v140, %v146
    %v153 = vshrl.u32 %v91, 9
    %v154 = vshrl.u32 %v92, 9
    %v155 = vshrl.u32 %v93, 9
    %v156 = vshrl.u32 %v94, 9
    %v157 = vshrl.u32 %v95, 9
    %v158 = vshrl.u32 %v96, 9
    %v159 = vor.u32 %v153, 1065353216
    %v160 = vor.u32 %v154, 1065353216
    %v161 = vor.u32 %v155, 1065353216
    %v162 = vor.u32 %v156, 1065353216
    %v163 = vor.u32 %v157, 1065353216
    %v164 = vor.u32 %v158, 1065353216
    %v171 = vshrl.u32 %v147, 9
    %v172 = vshrl.u32 %v148, 9
    %v173 = vshrl.u32 %v149, 9
    %v174 = vshrl.u32 %v150, 9
    %v175 = vshrl.u32 %v151, 9
    %v176 = vshrl.u32 %v152, 9
    %v177 = vor.u32 %v171, 1065353216
    %v178 = vor.u32 %v172, 1065353216
    %v179 = vor.u32 %v173, 1065353216
    %v180 = vor.u32 %v174, 1065353216
    %v181 = vor.u32 %v175, 1065353216
    %v182 = vor.u32 %v176, 1065353216
    %v189 = vsub.f32 2.0, %v159
    %v190 = vsub.f32 2.0, %v160
    %v191 = vsub.f32 2.0, %v161
    %v192 = vsub.f32 2.0, %v162
    %v193 = vsub.f32 2.0, %v163
    %v194 = vsub.f32 2.0, %v164
    %v195 = vsub.f32 %v177, 1.0
    %v196 = vsub.f32 %v178, 1.0
    %v197 = vsub.f32 %v179, 1.0
    %v198 = vsub.f32 %v180, 1.0
    %v199 = vsub.f32 %v181, 1.0
    %v200 = vsub.f32 %v182, 1.0
    %v201 = vlog2.pop %v189
    %v202 = vmul.f32 %v201, 0.6931472
    %v203 = vlog2.pop %v190
    %v204 = vmul.f32 %v203, 0.6931472
    %v205 = vlog2.pop %v191
    %v206 = vmul.f32 %v205, 0.6931472
    %v207 = vlog2.pop %v192
    %v208 = vmul.f32 %v207, 0.6931472
    %v209 = vlog2.pop %v193
    %v210 = vmul.f32 %v209, 0.6931472
    %v211 = vlog2.pop %v194
    %v212 = vmul.f32 %v211, 0.6931472
    %v213 = vmul.f32 %v202, -2.0
    %v214 = vmul.f32 %v204, -2.0
    %v215 = vmul.f32 %v206, -2.0
    %v216 = vmul.f32 %v208, -2.0
    %v217 = vmul.f32 %v210, -2.0
    %v218 = vmul.f32 %v212, -2.0
    %v219 = vrsqrt.pop %v213
    %v220 = vmul.f32 %v213, %v219
    %vm221 = vcmp.eq.f32.partialorder %v213, inf
    %v222 = vsel %vm221, %v213, %v220
    %vm223 = vcmp.eq.f32.partialorder %v213, 0.0
    %v224 = vand.u32 %v213, 2147483648
    %v225 = vsel %vm223, %v224, %v222
    %v226 = vrsqrt.pop %v214
    %v227 = vmul.f32 %v214, %v226
    %vm228 = vcmp.eq.f32.partialorder %v214, inf
    %v229 = vsel %vm228, %v214, %v227
    %vm230 = vcmp.eq.f32.partialorder %v214, 0.0
    %v231 = vand.u32 %v214, 2147483648
    %v232 = vsel %vm230, %v231, %v229
    %v233 = vrsqrt.pop %v215
    %v234 = vmul.f32 %v215, %v233
    %vm235 = vcmp.eq.f32.partialorder %v215, inf
    %v236 = vsel %vm235, %v215, %v234
    %vm237 = vcmp.eq.f32.partialorder %v215, 0.0
    %v238 = vand.u32 %v215, 2147483648
    %v239 = vsel %vm237, %v238, %v236
    %v240 = vrsqrt.pop %v216
    %v241 = vmul.f32 %v216, %v240
    %vm242 = vcmp.eq.f32.partialorder %v216, inf
    %v243 = vsel %vm242, %v216, %v241
    %vm244 = vcmp.eq.f32.partialorder %v216, 0.0
    %v245 = vand.u32 %v216, 2147483648
    %v246 = vsel %vm244, %v245, %v243
    %v247 = vrsqrt.pop %v217
    %v248 = vmul.f32 %v217, %v247
    %vm249 = vcmp.eq.f32.partialorder %v217, inf
    %v250 = vsel %vm249, %v217, %v248
    %vm251 = vcmp.eq.f32.partialorder %v217, 0.0
    %v252 = vand.u32 %v217, 2147483648
    %v253 = vsel %vm251, %v252, %v250
    %v254 = vrsqrt.pop %v218
    %v255 = vmul.f32 %v218, %v254
    %vm256 = vcmp.eq.f32.partialorder %v218, inf
    %v257 = vsel %vm256, %v218, %v255
    %vm258 = vcmp.eq.f32.partialorder %v218, 0.0
    %v259 = vand.u32 %v218, 2147483648
    %v260 = vsel %vm258, %v259, %v257
    %v261 = vmul.f32 %v195, 6.2831855
    %v262 = vmul.f32 %v196, 6.2831855
    %v263 = vmul.f32 %v197, 6.2831855
    %v264 = vmul.f32 %v198, 6.2831855
    %v265 = vmul.f32 %v199, 6.2831855
    %v266 = vmul.f32 %v200, 6.2831855
    %v267 = vand.u32 2147483647, %v261
    %vm268 = vcmp.le.f32.partialorder %v267, 0.7853982
    %vm269 = vcmp.lt.s32.totalorder %v261, 0
    %v270 = vand.u32 %v261, 2139095040
    %v271 = vshrl.u32 %v270, 23
    %v272 = vsub.s32 %v271, 127
    %v273 = vand.u32 2147483647, %v261
    %v274 = vand.u32 %v273, 8388607
    %v275 = vor.u32 %v274, 8388608
    %v276 = vsub.s32 0, %v275
    %v277 = vadd.s32 %v272, 1
    %vm278 = vcmp.gt.s32.totalorder %v277, 0
    %v279 = vsel %vm278, %v277, 0
    %v280 = vshrl.u32 %v279, 5
    %v281 = vand.u32 %v279, 31
    %v282 = vsub.s32 32, %v281
    %v283 = vshrl.u32 683565275, %v282
    %v284 = vshll.u32 683565275, %v281
    %v285 = vshrl.u32 2475754826, %v282
    %v286 = vor.u32 %v284, %v285
    %v287 = vshll.u32 2475754826, %v281
    %v288 = vshrl.u32 2131351028, %v282
    %v289 = vor.u32 %v287, %v288
    %v290 = vshll.u32 2131351028, %v281
    %v291 = vshrl.u32 2102212464, %v282
    %v292 = vor.u32 %v290, %v291
    %v293 = vshll.u32 2102212464, %v281
    %v294 = vshrl.u32 920167782, %v282
    %v295 = vor.u32 %v293, %v294
    %v296 = vshll.u32 920167782, %v281
    %v297 = vshrl.u32 1326507024, %v282
    %v298 = vor.u32 %v296, %v297
    %vm299 = vcmp.lt.s32.totalorder %v280, 1
    %vm300 = vcmp.lt.s32.totalorder %v280, 2
    %vm301 = vcmp.lt.s32.totalorder %v280, 3
    %vm302 = vcmp.lt.s32.totalorder %v280, 4
    %v303 = vsel %vm299, %v283, %v286
    %v304 = vsel %vm302, %v292, 2102212464
    %v305 = vsel %vm301, %v289, %v304
    %v306 = vsel %vm300, %v303, %v305
    %v307 = vsel %vm299, %v286, %v289
    %v308 = vsel %vm302, %v295, 920167782
    %v309 = vsel %vm301, %v292, %v308
    %v310 = vsel %vm300, %v307, %v309
    %v311 = vsel %vm299, %v289, %v292
    %v312 = vsel %vm302, %v298, 1326507024
    %v313 = vsel %vm301, %v295, %v312
    %v314 = vsel %vm300, %v311, %v313
    %v315 = vshll.u32 %v275, 8
    %v316 = vmul.u32.u64.compose %v315, %v314
    %v317 = vextract.low.u32 %v316
    %v318 = vextract.high.u32 %v316
    %v319 = vmul.u32.u64.compose %v315, %v310
    %v320 = vextract.low.u32 %v319
    %v321 = vextract.high.u32 %v319
    %v322 = vmul.u32 %v315, %v306
    %v323 = vadd.s32 %v318, %v320
    %vm324 = vc.u32 %v318, %v320
    %v325 = vadd.s32 %v321, 1
    %v326 = vsel %vm324, %v325, %v321
    %v327 = vadd.s32 %v322, %v326
    %v328 = vadd.s32 %v327, 536870912
    %v329 = vshrl.u32 %v328, 30
    %v330 = vshll.u32 %v329, 30
    %v331 = vsub.s32 %v327, %v330
    %vm332 = vcmp.lt.s32.totalorder %v331, 0
    %v333 = vsub.s32 0, %v331
    %v334 = vsel %vm332, %v333, %v331
    %v335 = vclz %v334
    %v336 = vsub.s32 %v335, 2
    %vm337 = vcmp.gt.s32.totalorder 0, %v336
    %v338 = vsel %vm337, 0, %v336
    %v339 = vsub.s32 32, %v338
    %v340 = vshll.u32 %v331, %v338
    %v341 = vshrl.u32 %v323, %v339
    %v342 = vor.u32 %v340, %v341
    %v343 = vsub.s32 4294967266, %v338
    %v344 = vadd.s32 %v343, 127
    %v345 = vshll.u32 %v344, 23
    %v346 = vor.u32 4788187, %v345
    %v347 = vand.u32 2147483647, %v346
    %v349 = vcvt.s32.f32 %v342
    %v350 = vmul.f32 %v349, %v347
    %v351 = vxor.u32 %v350, 2147483648
    %v352 = vsel %vm269, %v351, %v350
    %v353 = vsub.s32 4, %v329
    %v354 = vsel %vm269, %v353, %v329
    %v355 = vsel %vm268, %v261, %v352
    %v356 = vsel %vm268, 0, %v354
    %v357 = vcosq.f32.pop %v355
    %v358 = vsinq.f32.pop %v355
    %vm359 = vweird.f32 %v261
    %v360 = vand.u32 %v356, 3
    %vm361 = vcmp.lt.s32.totalorder %v360, 2
    %vm362 = vcmp.eq.s32.totalorder %v360, 0
    %v363 = vxor.u32 %v358, 2147483648
    %v364 = vsel %vm362, %v357, %v363
    %vm365 = vcmp.eq.s32.totalorder %v360, 2
    %v366 = vxor.u32 %v357, 2147483648
    %v367 = vsel %vm365, %v366, %v358
    %v368 = vsel %vm361, %v364, %v367
    %v369 = vsel %vm359, nan, %v368
    %v370 = vand.u32 2147483647, %v262
    %vm371 = vcmp.le.f32.partialorder %v370, 0.7853982
    %vm372 = vcmp.lt.s32.totalorder %v262, 0
    %v373 = vand.u32 %v262, 2139095040
    %v374 = vshrl.u32 %v373, 23
    %v375 = vsub.s32 %v374, 127
    %v376 = vand.u32 2147483647, %v262
    %v377 = vand.u32 %v376, 8388607
    %v378 = vor.u32 %v377, 8388608
    %v379 = vsub.s32 0, %v378
    %v380 = vadd.s32 %v375, 1
    %vm381 = vcmp.gt.s32.totalorder %v380, 0
    %v382 = vsel %vm381, %v380, 0
    %v383 = vshrl.u32 %v382, 5
    %v384 = vand.u32 %v382, 31
    %v385 = vsub.s32 32, %v384
    %v386 = vshrl.u32 683565275, %v385
    %v387 = vshll.u32 683565275, %v384
    %v388 = vshrl.u32 2475754826, %v385
    %v389 = vor.u32 %v387, %v388
    %v390 = vshll.u32 2475754826, %v384
    %v391 = vshrl.u32 2131351028, %v385
    %v392 = vor.u32 %v390, %v391
    %v393 = vshll.u32 2131351028, %v384
    %v394 = vshrl.u32 2102212464, %v385
    %v395 = vor.u32 %v393, %v394
    %v396 = vshll.u32 2102212464, %v384
    %v397 = vshrl.u32 920167782, %v385
    %v398 = vor.u32 %v396, %v397
    %v399 = vshll.u32 920167782, %v384
    %v400 = vshrl.u32 1326507024, %v385
    %v401 = vor.u32 %v399, %v400
    %vm402 = vcmp.lt.s32.totalorder %v383, 1
    %vm403 = vcmp.lt.s32.totalorder %v383, 2
    %vm404 = vcmp.lt.s32.totalorder %v383, 3
    %vm405 = vcmp.lt.s32.totalorder %v383, 4
    %v406 = vsel %vm402, %v386, %v389
    %v407 = vsel %vm405, %v395, 2102212464
    %v408 = vsel %vm404, %v392, %v407
    %v409 = vsel %vm403, %v406, %v408
    %v410 = vsel %vm402, %v389, %v392
    %v411 = vsel %vm405, %v398, 920167782
    %v412 = vsel %vm404, %v395, %v411
    %v413 = vsel %vm403, %v410, %v412
    %v414 = vsel %vm402, %v392, %v395
    %v415 = vsel %vm405, %v401, 1326507024
    %v416 = vsel %vm404, %v398, %v415
    %v417 = vsel %vm403, %v414, %v416
    %v418 = vshll.u32 %v378, 8
    %v419 = vmul.u32.u64.compose %v418, %v417
    %v420 = vextract.low.u32 %v419
    %v421 = vextract.high.u32 %v419
    %v422 = vmul.u32.u64.compose %v418, %v413
    %v423 = vextract.low.u32 %v422
    %v424 = vextract.high.u32 %v422
    %v425 = vmul.u32 %v418, %v409
    %v426 = vadd.s32 %v421, %v423
    %vm427 = vc.u32 %v421, %v423
    %v428 = vadd.s32 %v424, 1
    %v429 = vsel %vm427, %v428, %v424
    %v430 = vadd.s32 %v425, %v429
    %v431 = vadd.s32 %v430, 536870912
    %v432 = vshrl.u32 %v431, 30
    %v433 = vshll.u32 %v432, 30
    %v434 = vsub.s32 %v430, %v433
    %vm435 = vcmp.lt.s32.totalorder %v434, 0
    %v436 = vsub.s32 0, %v434
    %v437 = vsel %vm435, %v436, %v434
    %v438 = vclz %v437
    %v439 = vsub.s32 %v438, 2
    %vm440 = vcmp.gt.s32.totalorder 0, %v439
    %v441 = vsel %vm440, 0, %v439
    %v442 = vsub.s32 32, %v441
    %v443 = vshll.u32 %v434, %v441
    %v444 = vshrl.u32 %v426, %v442
    %v445 = vor.u32 %v443, %v444
    %v446 = vsub.s32 4294967266, %v441
    %v447 = vadd.s32 %v446, 127
    %v448 = vshll.u32 %v447, 23
    %v449 = vor.u32 4788187, %v448
    %v450 = vand.u32 2147483647, %v449
    %v452 = vcvt.s32.f32 %v445
    %v453 = vmul.f32 %v452, %v450
    %v454 = vxor.u32 %v453, 2147483648
    %v455 = vsel %vm372, %v454, %v453
    %v456 = vsub.s32 4, %v432
    %v457 = vsel %vm372, %v456, %v432
    %v458 = vsel %vm371, %v262, %v455
    %v459 = vsel %vm371, 0, %v457
    %v460 = vcosq.f32.pop %v458
    %v461 = vsinq.f32.pop %v458
    %vm462 = vweird.f32 %v262
    %v463 = vand.u32 %v459, 3
    %vm464 = vcmp.lt.s32.totalorder %v463, 2
    %vm465 = vcmp.eq.s32.totalorder %v463, 0
    %v466 = vxor.u32 %v461, 2147483648
    %v467 = vsel %vm465, %v460, %v466
    %vm468 = vcmp.eq.s32.totalorder %v463, 2
    %v469 = vxor.u32 %v460, 2147483648
    %v470 = vsel %vm468, %v469, %v461
    %v471 = vsel %vm464, %v467, %v470
    %v472 = vsel %vm462, nan, %v471
    %v473 = vand.u32 2147483647, %v263
    %vm474 = vcmp.le.f32.partialorder %v473, 0.7853982
    %vm475 = vcmp.lt.s32.totalorder %v263, 0
    %v476 = vand.u32 %v263, 2139095040
    %v477 = vshrl.u32 %v476, 23
    %v478 = vsub.s32 %v477, 127
    %v479 = vand.u32 2147483647, %v263
    %v480 = vand.u32 %v479, 8388607
    %v481 = vor.u32 %v480, 8388608
    %v482 = vsub.s32 0, %v481
    %v483 = vadd.s32 %v478, 1
    %vm484 = vcmp.gt.s32.totalorder %v483, 0
    %v485 = vsel %vm484, %v483, 0
    %v486 = vshrl.u32 %v485, 5
    %v487 = vand.u32 %v485, 31
    %v488 = vsub.s32 32, %v487
    %v489 = vshrl.u32 683565275, %v488
    %v490 = vshll.u32 683565275, %v487
    %v491 = vshrl.u32 2475754826, %v488
    %v492 = vor.u32 %v490, %v491
    %v493 = vshll.u32 2475754826, %v487
    %v494 = vshrl.u32 2131351028, %v488
    %v495 = vor.u32 %v493, %v494
    %v496 = vshll.u32 2131351028, %v487
    %v497 = vshrl.u32 2102212464, %v488
    %v498 = vor.u32 %v496, %v497
    %v499 = vshll.u32 2102212464, %v487
    %v500 = vshrl.u32 920167782, %v488
    %v501 = vor.u32 %v499, %v500
    %v502 = vshll.u32 920167782, %v487
    %v503 = vshrl.u32 1326507024, %v488
    %v504 = vor.u32 %v502, %v503
    %vm505 = vcmp.lt.s32.totalorder %v486, 1
    %vm506 = vcmp.lt.s32.totalorder %v486, 2
    %vm507 = vcmp.lt.s32.totalorder %v486, 3
    %vm508 = vcmp.lt.s32.totalorder %v486, 4
    %v509 = vsel %vm505, %v489, %v492
    %v510 = vsel %vm508, %v498, 2102212464
    %v511 = vsel %vm507, %v495, %v510
    %v512 = vsel %vm506, %v509, %v511
    %v513 = vsel %vm505, %v492, %v495
    %v514 = vsel %vm508, %v501, 920167782
    %v515 = vsel %vm507, %v498, %v514
    %v516 = vsel %vm506, %v513, %v515
    %v517 = vsel %vm505, %v495, %v498
    %v518 = vsel %vm508, %v504, 1326507024
    %v519 = vsel %vm507, %v501, %v518
    %v520 = vsel %vm506, %v517, %v519
    %v521 = vshll.u32 %v481, 8
    %v522 = vmul.u32.u64.compose %v521, %v520
    %v523 = vextract.low.u32 %v522
    %v524 = vextract.high.u32 %v522
    %v525 = vmul.u32.u64.compose %v521, %v516
    %v526 = vextract.low.u32 %v525
    %v527 = vextract.high.u32 %v525
    %v528 = vmul.u32 %v521, %v512
    %v529 = vadd.s32 %v524, %v526
    %vm530 = vc.u32 %v524, %v526
    %v531 = vadd.s32 %v527, 1
    %v532 = vsel %vm530, %v531, %v527
    %v533 = vadd.s32 %v528, %v532
    %v534 = vadd.s32 %v533, 536870912
    %v535 = vshrl.u32 %v534, 30
    %v536 = vshll.u32 %v535, 30
    %v537 = vsub.s32 %v533, %v536
    %vm538 = vcmp.lt.s32.totalorder %v537, 0
    %v539 = vsub.s32 0, %v537
    %v540 = vsel %vm538, %v539, %v537
    %v541 = vclz %v540
    %v542 = vsub.s32 %v541, 2
    %vm543 = vcmp.gt.s32.totalorder 0, %v542
    %v544 = vsel %vm543, 0, %v542
    %v545 = vsub.s32 32, %v544
    %v546 = vshll.u32 %v537, %v544
    %v547 = vshrl.u32 %v529, %v545
    %v548 = vor.u32 %v546, %v547
    %v549 = vsub.s32 4294967266, %v544
    %v550 = vadd.s32 %v549, 127
    %v551 = vshll.u32 %v550, 23
    %v552 = vor.u32 4788187, %v551
    %v553 = vand.u32 2147483647, %v552
    %v555 = vcvt.s32.f32 %v548
    %v556 = vmul.f32 %v555, %v553
    %v557 = vxor.u32 %v556, 2147483648
    %v558 = vsel %vm475, %v557, %v556
    %v559 = vsub.s32 4, %v535
    %v560 = vsel %vm475, %v559, %v535
    %v561 = vsel %vm474, %v263, %v558
    %v562 = vsel %vm474, 0, %v560
    %v563 = vcosq.f32.pop %v561
    %v564 = vsinq.f32.pop %v561
    %vm565 = vweird.f32 %v263
    %v566 = vand.u32 %v562, 3
    %vm567 = vcmp.lt.s32.totalorder %v566, 2
    %vm568 = vcmp.eq.s32.totalorder %v566, 0
    %v569 = vxor.u32 %v564, 2147483648
    %v570 = vsel %vm568, %v563, %v569
    %vm571 = vcmp.eq.s32.totalorder %v566, 2
    %v572 = vxor.u32 %v563, 2147483648
    %v573 = vsel %vm571, %v572, %v564
    %v574 = vsel %vm567, %v570, %v573
    %v575 = vsel %vm565, nan, %v574
    %v576 = vand.u32 2147483647, %v264
    %vm577 = vcmp.le.f32.partialorder %v576, 0.7853982
    %vm578 = vcmp.lt.s32.totalorder %v264, 0
    %v579 = vand.u32 %v264, 2139095040
    %v580 = vshrl.u32 %v579, 23
    %v581 = vsub.s32 %v580, 127
    %v582 = vand.u32 2147483647, %v264
    %v583 = vand.u32 %v582, 8388607
    %v584 = vor.u32 %v583, 8388608
    %v585 = vsub.s32 0, %v584
    %v586 = vadd.s32 %v581, 1
    %vm587 = vcmp.gt.s32.totalorder %v586, 0
    %v588 = vsel %vm587, %v586, 0
    %v589 = vshrl.u32 %v588, 5
    %v590 = vand.u32 %v588, 31
    %v591 = vsub.s32 32, %v590
    %v592 = vshrl.u32 683565275, %v591
    %v593 = vshll.u32 683565275, %v590
    %v594 = vshrl.u32 2475754826, %v591
    %v595 = vor.u32 %v593, %v594
    %v596 = vshll.u32 2475754826, %v590
    %v597 = vshrl.u32 2131351028, %v591
    %v598 = vor.u32 %v596, %v597
    %v599 = vshll.u32 2131351028, %v590
    %v600 = vshrl.u32 2102212464, %v591
    %v601 = vor.u32 %v599, %v600
    %v602 = vshll.u32 2102212464, %v590
    %v603 = vshrl.u32 920167782, %v591
    %v604 = vor.u32 %v602, %v603
    %v605 = vshll.u32 920167782, %v590
    %v606 = vshrl.u32 1326507024, %v591
    %v607 = vor.u32 %v605, %v606
    %vm608 = vcmp.lt.s32.totalorder %v589, 1
    %vm609 = vcmp.lt.s32.totalorder %v589, 2
    %vm610 = vcmp.lt.s32.totalorder %v589, 3
    %vm611 = vcmp.lt.s32.totalorder %v589, 4
    %v612 = vsel %vm608, %v592, %v595
    %v613 = vsel %vm611, %v601, 2102212464
    %v614 = vsel %vm610, %v598, %v613
    %v615 = vsel %vm609, %v612, %v614
    %v616 = vsel %vm608, %v595, %v598
    %v617 = vsel %vm611, %v604, 920167782
    %v618 = vsel %vm610, %v601, %v617
    %v619 = vsel %vm609, %v616, %v618
    %v620 = vsel %vm608, %v598, %v601
    %v621 = vsel %vm611, %v607, 1326507024
    %v622 = vsel %vm610, %v604, %v621
    %v623 = vsel %vm609, %v620, %v622
    %v624 = vshll.u32 %v584, 8
    %v625 = vmul.u32.u64.compose %v624, %v623
    %v626 = vextract.low.u32 %v625
    %v627 = vextract.high.u32 %v625
    %v628 = vmul.u32.u64.compose %v624, %v619
    %v629 = vextract.low.u32 %v628
    %v630 = vextract.high.u32 %v628
    %v631 = vmul.u32 %v624, %v615
    %v632 = vadd.s32 %v627, %v629
    %vm633 = vc.u32 %v627, %v629
    %v634 = vadd.s32 %v630, 1
    %v635 = vsel %vm633, %v634, %v630
    %v636 = vadd.s32 %v631, %v635
    %v637 = vadd.s32 %v636, 536870912
    %v638 = vshrl.u32 %v637, 30
    %v639 = vshll.u32 %v638, 30
    %v640 = vsub.s32 %v636, %v639
    %vm641 = vcmp.lt.s32.totalorder %v640, 0
    %v642 = vsub.s32 0, %v640
    %v643 = vsel %vm641, %v642, %v640
    %v644 = vclz %v643
    %v645 = vsub.s32 %v644, 2
    %vm646 = vcmp.gt.s32.totalorder 0, %v645
    %v647 = vsel %vm646, 0, %v645
    %v648 = vsub.s32 32, %v647
    %v649 = vshll.u32 %v640, %v647
    %v650 = vshrl.u32 %v632, %v648
    %v651 = vor.u32 %v649, %v650
    %v652 = vsub.s32 4294967266, %v647
    %v653 = vadd.s32 %v652, 127
    %v654 = vshll.u32 %v653, 23
    %v655 = vor.u32 4788187, %v654
    %v656 = vand.u32 2147483647, %v655
    %v658 = vcvt.s32.f32 %v651
    %v659 = vmul.f32 %v658, %v656
    %v660 = vxor.u32 %v659, 2147483648
    %v661 = vsel %vm578, %v660, %v659
    %v662 = vsub.s32 4, %v638
    %v663 = vsel %vm578, %v662, %v638
    %v664 = vsel %vm577, %v264, %v661
    %v665 = vsel %vm577, 0, %v663
    %v666 = vcosq.f32.pop %v664
    %v667 = vsinq.f32.pop %v664
    %vm668 = vweird.f32 %v264
    %v669 = vand.u32 %v665, 3
    %vm670 = vcmp.lt.s32.totalorder %v669, 2
    %vm671 = vcmp.eq.s32.totalorder %v669, 0
    %v672 = vxor.u32 %v667, 2147483648
    %v673 = vsel %vm671, %v666, %v672
    %vm674 = vcmp.eq.s32.totalorder %v669, 2
    %v675 = vxor.u32 %v666, 2147483648
    %v676 = vsel %vm674, %v675, %v667
    %v677 = vsel %vm670, %v673, %v676
    %v678 = vsel %vm668, nan, %v677
    %v679 = vand.u32 2147483647, %v265
    %vm680 = vcmp.le.f32.partialorder %v679, 0.7853982
    %vm681 = vcmp.lt.s32.totalorder %v265, 0
    %v682 = vand.u32 %v265, 2139095040
    %v683 = vshrl.u32 %v682, 23
    %v684 = vsub.s32 %v683, 127
    %v685 = vand.u32 2147483647, %v265
    %v686 = vand.u32 %v685, 8388607
    %v687 = vor.u32 %v686, 8388608
    %v688 = vsub.s32 0, %v687
    %v689 = vadd.s32 %v684, 1
    %vm690 = vcmp.gt.s32.totalorder %v689, 0
    %v691 = vsel %vm690, %v689, 0
    %v692 = vshrl.u32 %v691, 5
    %v693 = vand.u32 %v691, 31
    %v694 = vsub.s32 32, %v693
    %v695 = vshrl.u32 683565275, %v694
    %v696 = vshll.u32 683565275, %v693
    %v697 = vshrl.u32 2475754826, %v694
    %v698 = vor.u32 %v696, %v697
    %v699 = vshll.u32 2475754826, %v693
    %v700 = vshrl.u32 2131351028, %v694
    %v701 = vor.u32 %v699, %v700
    %v702 = vshll.u32 2131351028, %v693
    %v703 = vshrl.u32 2102212464, %v694
    %v704 = vor.u32 %v702, %v703
    %v705 = vshll.u32 2102212464, %v693
    %v706 = vshrl.u32 920167782, %v694
    %v707 = vor.u32 %v705, %v706
    %v708 = vshll.u32 920167782, %v693
    %v709 = vshrl.u32 1326507024, %v694
    %v710 = vor.u32 %v708, %v709
    %vm711 = vcmp.lt.s32.totalorder %v692, 1
    %vm712 = vcmp.lt.s32.totalorder %v692, 2
    %vm713 = vcmp.lt.s32.totalorder %v692, 3
    %vm714 = vcmp.lt.s32.totalorder %v692, 4
    %v715 = vsel %vm711, %v695, %v698
    %v716 = vsel %vm714, %v704, 2102212464
    %v717 = vsel %vm713, %v701, %v716
    %v718 = vsel %vm712, %v715, %v717
    %v719 = vsel %vm711, %v698, %v701
    %v720 = vsel %vm714, %v707, 920167782
    %v721 = vsel %vm713, %v704, %v720
    %v722 = vsel %vm712, %v719, %v721
    %v723 = vsel %vm711, %v701, %v704
    %v724 = vsel %vm714, %v710, 1326507024
    %v725 = vsel %vm713, %v707, %v724
    %v726 = vsel %vm712, %v723, %v725
    %v727 = vshll.u32 %v687, 8
    %v728 = vmul.u32.u64.compose %v727, %v726
    %v729 = vextract.low.u32 %v728
    %v730 = vextract.high.u32 %v728
    %v731 = vmul.u32.u64.compose %v727, %v722
    %v732 = vextract.low.u32 %v731
    %v733 = vextract.high.u32 %v731
    %v734 = vmul.u32 %v727, %v718
    %v735 = vadd.s32 %v730, %v732
    %vm736 = vc.u32 %v730, %v732
    %v737 = vadd.s32 %v733, 1
    %v738 = vsel %vm736, %v737, %v733
    %v739 = vadd.s32 %v734, %v738
    %v740 = vadd.s32 %v739, 536870912
    %v741 = vshrl.u32 %v740, 30
    %v742 = vshll.u32 %v741, 30
    %v743 = vsub.s32 %v739, %v742
    %vm744 = vcmp.lt.s32.totalorder %v743, 0
    %v745 = vsub.s32 0, %v743
    %v746 = vsel %vm744, %v745, %v743
    %v747 = vclz %v746
    %v748 = vsub.s32 %v747, 2
    %vm749 = vcmp.gt.s32.totalorder 0, %v748
    %v750 = vsel %vm749, 0, %v748
    %v751 = vsub.s32 32, %v750
    %v752 = vshll.u32 %v743, %v750
    %v753 = vshrl.u32 %v735, %v751
    %v754 = vor.u32 %v752, %v753
    %v755 = vsub.s32 4294967266, %v750
    %v756 = vadd.s32 %v755, 127
    %v757 = vshll.u32 %v756, 23
    %v758 = vor.u32 4788187, %v757
    %v759 = vand.u32 2147483647, %v758
    %v761 = vcvt.s32.f32 %v754
    %v762 = vmul.f32 %v761, %v759
    %v763 = vxor.u32 %v762, 2147483648
    %v764 = vsel %vm681, %v763, %v762
    %v765 = vsub.s32 4, %v741
    %v766 = vsel %vm681, %v765, %v741
    %v767 = vsel %vm680, %v265, %v764
    %v768 = vsel %vm680, 0, %v766
    %v769 = vcosq.f32.pop %v767
    %v770 = vsinq.f32.pop %v767
    %vm771 = vweird.f32 %v265
    %v772 = vand.u32 %v768, 3
    %vm773 = vcmp.lt.s32.totalorder %v772, 2
    %vm774 = vcmp.eq.s32.totalorder %v772, 0
    %v775 = vxor.u32 %v770, 2147483648
    %v776 = vsel %vm774, %v769, %v775
    %vm777 = vcmp.eq.s32.totalorder %v772, 2
    %v778 = vxor.u32 %v769, 2147483648
    %v779 = vsel %vm777, %v778, %v770
    %v780 = vsel %vm773, %v776, %v779
    %v781 = vsel %vm771, nan, %v780
    %v782 = vand.u32 2147483647, %v266
    %vm783 = vcmp.le.f32.partialorder %v782, 0.7853982
    %vm784 = vcmp.lt.s32.totalorder %v266, 0
    %v785 = vand.u32 %v266, 2139095040
    %v786 = vshrl.u32 %v785, 23
    %v787 = vsub.s32 %v786, 127
    %v788 = vand.u32 2147483647, %v266
    %v789 = vand.u32 %v788, 8388607
    %v790 = vor.u32 %v789, 8388608
    %v791 = vsub.s32 0, %v790
    %v792 = vadd.s32 %v787, 1
    %vm793 = vcmp.gt.s32.totalorder %v792, 0
    %v794 = vsel %vm793, %v792, 0
    %v795 = vshrl.u32 %v794, 5
    %v796 = vand.u32 %v794, 31
    %v797 = vsub.s32 32, %v796
    %v798 = vshrl.u32 683565275, %v797
    %v799 = vshll.u32 683565275, %v796
    %v800 = vshrl.u32 2475754826, %v797
    %v801 = vor.u32 %v799, %v800
    %v802 = vshll.u32 2475754826, %v796
    %v803 = vshrl.u32 2131351028, %v797
    %v804 = vor.u32 %v802, %v803
    %v805 = vshll.u32 2131351028, %v796
    %v806 = vshrl.u32 2102212464, %v797
    %v807 = vor.u32 %v805, %v806
    %v808 = vshll.u32 2102212464, %v796
    %v809 = vshrl.u32 920167782, %v797
    %v810 = vor.u32 %v808, %v809
    %v811 = vshll.u32 920167782, %v796
    %v812 = vshrl.u32 1326507024, %v797
    %v813 = vor.u32 %v811, %v812
    %vm814 = vcmp.lt.s32.totalorder %v795, 1
    %vm815 = vcmp.lt.s32.totalorder %v795, 2
    %vm816 = vcmp.lt.s32.totalorder %v795, 3
    %vm817 = vcmp.lt.s32.totalorder %v795, 4
    %v818 = vsel %vm814, %v798, %v801
    %v819 = vsel %vm817, %v807, 2102212464
    %v820 = vsel %vm816, %v804, %v819
    %v821 = vsel %vm815, %v818, %v820
    %v822 = vsel %vm814, %v801, %v804
    %v823 = vsel %vm817, %v810, 920167782
    %v824 = vsel %vm816, %v807, %v823
    %v825 = vsel %vm815, %v822, %v824
    %v826 = vsel %vm814, %v804, %v807
    %v827 = vsel %vm817, %v813, 1326507024
    %v828 = vsel %vm816, %v810, %v827
    %v829 = vsel %vm815, %v826, %v828
    %v830 = vshll.u32 %v790, 8
    %v831 = vmul.u32.u64.compose %v830, %v829
    %v832 = vextract.low.u32 %v831
    %v833 = vextract.high.u32 %v831
    %v834 = vmul.u32.u64.compose %v830, %v825
    %v835 = vextract.low.u32 %v834
    %v836 = vextract.high.u32 %v834
    %v837 = vmul.u32 %v830, %v821
    %v838 = vadd.s32 %v833, %v835
    %vm839 = vc.u32 %v833, %v835
    %v840 = vadd.s32 %v836, 1
    %v841 = vsel %vm839, %v840, %v836
    %v842 = vadd.s32 %v837, %v841
    %v843 = vadd.s32 %v842, 536870912
    %v844 = vshrl.u32 %v843, 30
    %v845 = vshll.u32 %v844, 30
    %v846 = vsub.s32 %v842, %v845
    %vm847 = vcmp.lt.s32.totalorder %v846, 0
    %v848 = vsub.s32 0, %v846
    %v849 = vsel %vm847, %v848, %v846
    %v850 = vclz %v849
    %v851 = vsub.s32 %v850, 2
    %vm852 = vcmp.gt.s32.totalorder 0, %v851
    %v853 = vsel %vm852, 0, %v851
    %v854 = vsub.s32 32, %v853
    %v855 = vshll.u32 %v846, %v853
    %v856 = vshrl.u32 %v838, %v854
    %v857 = vor.u32 %v855, %v856
    %v858 = vsub.s32 4294967266, %v853
    %v859 = vadd.s32 %v858, 127
    %v860 = vshll.u32 %v859, 23
    %v861 = vor.u32 4788187, %v860
    %v862 = vand.u32 2147483647, %v861
    %v864 = vcvt.s32.f32 %v857
    %v865 = vmul.f32 %v864, %v862
    %v866 = vxor.u32 %v865, 2147483648
    %v867 = vsel %vm784, %v866, %v865
    %v868 = vsub.s32 4, %v844
    %v869 = vsel %vm784, %v868, %v844
    %v870 = vsel %vm783, %v266, %v867
    %v871 = vsel %vm783, 0, %v869
    %v872 = vcosq.f32.pop %v870
    %v873 = vsinq.f32.pop %v870
    %vm874 = vweird.f32 %v266
    %v875 = vand.u32 %v871, 3
    %vm876 = vcmp.lt.s32.totalorder %v875, 2
    %vm877 = vcmp.eq.s32.totalorder %v875, 0
    %v878 = vxor.u32 %v873, 2147483648
    %v879 = vsel %vm877, %v872, %v878
    %vm880 = vcmp.eq.s32.totalorder %v875, 2
    %v881 = vxor.u32 %v872, 2147483648
    %v882 = vsel %vm880, %v881, %v873
    %v883 = vsel %vm876, %v879, %v882
    %v884 = vsel %vm874, nan, %v883
    %v885 = vmul.f32 %v225, %v369
    %v886 = vmul.f32 %v232, %v472
    %v887 = vmul.f32 %v239, %v575
    %v888 = vmul.f32 %v246, %v678
    %v889 = vmul.f32 %v253, %v781
    %v890 = vmul.f32 %v260, %v884
    %891 = vst [vmem:[#allocation3] sm:$0xff] %v885
    %892 = vst [vmem:[#allocation3 + $0x8] sm:$0xff] %v886
    %893 = vst [vmem:[#allocation3 + $0x10] sm:$0xff] %v887
    %894 = vst [vmem:[#allocation3 + $0x18] sm:$0xff] %v888
    %895 = vst [vmem:[#allocation3 + $0x20] sm:$0xff] %v889
    %896 = vst [vmem:[#allocation3 + $0x28] sm:$0xff] %v890
    %v897 = vand.u32 2147483647, %v261
    %vm898 = vcmp.le.f32.partialorder %v897, 0.7853982
    %vm899 = vcmp.lt.s32.totalorder %v261, 0
    %v900 = vand.u32 %v261, 2139095040
    %v901 = vshrl.u32 %v900, 23
    %v902 = vsub.s32 %v901, 127
    %v903 = vand.u32 2147483647, %v261
    %v904 = vand.u32 %v903, 8388607
    %v905 = vor.u32 %v904, 8388608
    %v906 = vsub.s32 0, %v905
    %v907 = vadd.s32 %v902, 1
    %vm908 = vcmp.gt.s32.totalorder %v907, 0
    %v909 = vsel %vm908, %v907, 0
    %v910 = vshrl.u32 %v909, 5
    %v911 = vand.u32 %v909, 31
    %v912 = vsub.s32 32, %v911
    %v913 = vshrl.u32 683565275, %v912
    %v914 = vshll.u32 683565275, %v911
    %v915 = vshrl.u32 2475754826, %v912
    %v916 = vor.u32 %v914, %v915
    %v917 = vshll.u32 2475754826, %v911
    %v918 = vshrl.u32 2131351028, %v912
    %v919 = vor.u32 %v917, %v918
    %v920 = vshll.u32 2131351028, %v911
    %v921 = vshrl.u32 2102212464, %v912
    %v922 = vor.u32 %v920, %v921
    %v923 = vshll.u32 2102212464, %v911
    %v924 = vshrl.u32 920167782, %v912
    %v925 = vor.u32 %v923, %v924
    %v926 = vshll.u32 920167782, %v911
    %v927 = vshrl.u32 1326507024, %v912
    %v928 = vor.u32 %v926, %v927
    %vm929 = vcmp.lt.s32.totalorder %v910, 1
    %vm930 = vcmp.lt.s32.totalorder %v910, 2
    %vm931 = vcmp.lt.s32.totalorder %v910, 3
    %vm932 = vcmp.lt.s32.totalorder %v910, 4
    %v933 = vsel %vm929, %v913, %v916
    %v934 = vsel %vm932, %v922, 2102212464
    %v935 = vsel %vm931, %v919, %v934
    %v936 = vsel %vm930, %v933, %v935
    %v937 = vsel %vm929, %v916, %v919
    %v938 = vsel %vm932, %v925, 920167782
    %v939 = vsel %vm931, %v922, %v938
    %v940 = vsel %vm930, %v937, %v939
    %v941 = vsel %vm929, %v919, %v922
    %v942 = vsel %vm932, %v928, 1326507024
    %v943 = vsel %vm931, %v925, %v942
    %v944 = vsel %vm930, %v941, %v943
    %v945 = vshll.u32 %v905, 8
    %v946 = vmul.u32.u64.compose %v945, %v944
    %v947 = vextract.low.u32 %v946
    %v948 = vextract.high.u32 %v946
    %v949 = vmul.u32.u64.compose %v945, %v940
    %v950 = vextract.low.u32 %v949
    %v951 = vextract.high.u32 %v949
    %v952 = vmul.u32 %v945, %v936
    %v953 = vadd.s32 %v948, %v950
    %vm954 = vc.u32 %v948, %v950
    %v955 = vadd.s32 %v951, 1
    %v956 = vsel %vm954, %v955, %v951
    %v957 = vadd.s32 %v952, %v956
    %v958 = vadd.s32 %v957, 536870912
    %v959 = vshrl.u32 %v958, 30
    %v960 = vshll.u32 %v959, 30
    %v961 = vsub.s32 %v957, %v960
    %vm962 = vcmp.lt.s32.totalorder %v961, 0
    %v963 = vsub.s32 0, %v961
    %v964 = vsel %vm962, %v963, %v961
    %v965 = vclz %v964
    %v966 = vsub.s32 %v965, 2
    %vm967 = vcmp.gt.s32.totalorder 0, %v966
    %v968 = vsel %vm967, 0, %v966
    %v969 = vsub.s32 32, %v968
    %v970 = vshll.u32 %v961, %v968
    %v971 = vshrl.u32 %v953, %v969
    %v972 = vor.u32 %v970, %v971
    %v973 = vsub.s32 4294967266, %v968
    %v974 = vadd.s32 %v973, 127
    %v975 = vshll.u32 %v974, 23
    %v976 = vor.u32 4788187, %v975
    %v977 = vand.u32 2147483647, %v976
    %v979 = vcvt.s32.f32 %v972
    %v980 = vmul.f32 %v979, %v977
    %v981 = vxor.u32 %v980, 2147483648
    %v982 = vsel %vm899, %v981, %v980
    %v983 = vsub.s32 4, %v959
    %v984 = vsel %vm899, %v983, %v959
    %v985 = vsel %vm898, %v261, %v982
    %v986 = vsel %vm898, 0, %v984
    %v987 = vcosq.f32.pop %v985
    %v988 = vsinq.f32.pop %v985
    %vm989 = vweird.f32 %v261
    %v990 = vadd.s32 %v986, 3
    %v991 = vand.u32 %v990, 3
    %vm992 = vcmp.lt.s32.totalorder %v991, 2
    %vm993 = vcmp.eq.s32.totalorder %v991, 0
    %v994 = vxor.u32 %v988, 2147483648
    %v995 = vsel %vm993, %v987, %v994
    %vm996 = vcmp.eq.s32.totalorder %v991, 2
    %v997 = vxor.u32 %v987, 2147483648
    %v998 = vsel %vm996, %v997, %v988
    %v999 = vsel %vm992, %v995, %v998
    %v1000 = vsel %vm989, nan, %v999
    %v1001 = vand.u32 2147483647, %v262
    %vm1002 = vcmp.le.f32.partialorder %v1001, 0.7853982
    %vm1003 = vcmp.lt.s32.totalorder %v262, 0
    %v1004 = vand.u32 %v262, 2139095040
    %v1005 = vshrl.u32 %v1004, 23
    %v1006 = vsub.s32 %v1005, 127
    %v1007 = vand.u32 2147483647, %v262
    %v1008 = vand.u32 %v1007, 8388607
    %v1009 = vor.u32 %v1008, 8388608
    %v1010 = vsub.s32 0, %v1009
    %v1011 = vadd.s32 %v1006, 1
    %vm1012 = vcmp.gt.s32.totalorder %v1011, 0
    %v1013 = vsel %vm1012, %v1011, 0
    %v1014 = vshrl.u32 %v1013, 5
    %v1015 = vand.u32 %v1013, 31
    %v1016 = vsub.s32 32, %v1015
    %v1017 = vshrl.u32 683565275, %v1016
    %v1018 = vshll.u32 683565275, %v1015
    %v1019 = vshrl.u32 2475754826, %v1016
    %v1020 = vor.u32 %v1018, %v1019
    %v1021 = vshll.u32 2475754826, %v1015
    %v1022 = vshrl.u32 2131351028, %v1016
    %v1023 = vor.u32 %v1021, %v1022
    %v1024 = vshll.u32 2131351028, %v1015
    %v1025 = vshrl.u32 2102212464, %v1016
    %v1026 = vor.u32 %v1024, %v1025
    %v1027 = vshll.u32 2102212464, %v1015
    %v1028 = vshrl.u32 920167782, %v1016
    %v1029 = vor.u32 %v1027, %v1028
    %v1030 = vshll.u32 920167782, %v1015
    %v1031 = vshrl.u32 1326507024, %v1016
    %v1032 = vor.u32 %v1030, %v1031
    %vm1033 = vcmp.lt.s32.totalorder %v1014, 1
    %vm1034 = vcmp.lt.s32.totalorder %v1014, 2
    %vm1035 = vcmp.lt.s32.totalorder %v1014, 3
    %vm1036 = vcmp.lt.s32.totalorder %v1014, 4
    %v1037 = vsel %vm1033, %v1017, %v1020
    %v1038 = vsel %vm1036, %v1026, 2102212464
    %v1039 = vsel %vm1035, %v1023, %v1038
    %v1040 = vsel %vm1034, %v1037, %v1039
    %v1041 = vsel %vm1033, %v1020, %v1023
    %v1042 = vsel %vm1036, %v1029, 920167782
    %v1043 = vsel %vm1035, %v1026, %v1042
    %v1044 = vsel %vm1034, %v1041, %v1043
    %v1045 = vsel %vm1033, %v1023, %v1026
    %v1046 = vsel %vm1036, %v1032, 1326507024
    %v1047 = vsel %vm1035, %v1029, %v1046
    %v1048 = vsel %vm1034, %v1045, %v1047
    %v1049 = vshll.u32 %v1009, 8
    %v1050 = vmul.u32.u64.compose %v1049, %v1048
    %v1051 = vextract.low.u32 %v1050
    %v1052 = vextract.high.u32 %v1050
    %v1053 = vmul.u32.u64.compose %v1049, %v1044
    %v1054 = vextract.low.u32 %v1053
    %v1055 = vextract.high.u32 %v1053
    %v1056 = vmul.u32 %v1049, %v1040
    %v1057 = vadd.s32 %v1052, %v1054
    %vm1058 = vc.u32 %v1052, %v1054
    %v1059 = vadd.s32 %v1055, 1
    %v1060 = vsel %vm1058, %v1059, %v1055
    %v1061 = vadd.s32 %v1056, %v1060
    %v1062 = vadd.s32 %v1061, 536870912
    %v1063 = vshrl.u32 %v1062, 30
    %v1064 = vshll.u32 %v1063, 30
    %v1065 = vsub.s32 %v1061, %v1064
    %vm1066 = vcmp.lt.s32.totalorder %v1065, 0
    %v1067 = vsub.s32 0, %v1065
    %v1068 = vsel %vm1066, %v1067, %v1065
    %v1069 = vclz %v1068
    %v1070 = vsub.s32 %v1069, 2
    %vm1071 = vcmp.gt.s32.totalorder 0, %v1070
    %v1072 = vsel %vm1071, 0, %v1070
    %v1073 = vsub.s32 32, %v1072
    %v1074 = vshll.u32 %v1065, %v1072
    %v1075 = vshrl.u32 %v1057, %v1073
    %v1076 = vor.u32 %v1074, %v1075
    %v1077 = vsub.s32 4294967266, %v1072
    %v1078 = vadd.s32 %v1077, 127
    %v1079 = vshll.u32 %v1078, 23
    %v1080 = vor.u32 4788187, %v1079
    %v1081 = vand.u32 2147483647, %v1080
    %v1083 = vcvt.s32.f32 %v1076
    %v1084 = vmul.f32 %v1083, %v1081
    %v1085 = vxor.u32 %v1084, 2147483648
    %v1086 = vsel %vm1003, %v1085, %v1084
    %v1087 = vsub.s32 4, %v1063
    %v1088 = vsel %vm1003, %v1087, %v1063
    %v1089 = vsel %vm1002, %v262, %v1086
    %v1090 = vsel %vm1002, 0, %v1088
    %v1091 = vcosq.f32.pop %v1089
    %v1092 = vsinq.f32.pop %v1089
    %vm1093 = vweird.f32 %v262
    %v1094 = vadd.s32 %v1090, 3
    %v1095 = vand.u32 %v1094, 3
    %vm1096 = vcmp.lt.s32.totalorder %v1095, 2
    %vm1097 = vcmp.eq.s32.totalorder %v1095, 0
    %v1098 = vxor.u32 %v1092, 2147483648
    %v1099 = vsel %vm1097, %v1091, %v1098
    %vm1100 = vcmp.eq.s32.totalorder %v1095, 2
    %v1101 = vxor.u32 %v1091, 2147483648
    %v1102 = vsel %vm1100, %v1101, %v1092
    %v1103 = vsel %vm1096, %v1099, %v1102
    %v1104 = vsel %vm1093, nan, %v1103
    %v1105 = vand.u32 2147483647, %v263
    %vm1106 = vcmp.le.f32.partialorder %v1105, 0.7853982
    %vm1107 = vcmp.lt.s32.totalorder %v263, 0
    %v1108 = vand.u32 %v263, 2139095040
    %v1109 = vshrl.u32 %v1108, 23
    %v1110 = vsub.s32 %v1109, 127
    %v1111 = vand.u32 2147483647, %v263
    %v1112 = vand.u32 %v1111, 8388607
    %v1113 = vor.u32 %v1112, 8388608
    %v1114 = vsub.s32 0, %v1113
    %v1115 = vadd.s32 %v1110, 1
    %vm1116 = vcmp.gt.s32.totalorder %v1115, 0
    %v1117 = vsel %vm1116, %v1115, 0
    %v1118 = vshrl.u32 %v1117, 5
    %v1119 = vand.u32 %v1117, 31
    %v1120 = vsub.s32 32, %v1119
    %v1121 = vshrl.u32 683565275, %v1120
    %v1122 = vshll.u32 683565275, %v1119
    %v1123 = vshrl.u32 2475754826, %v1120
    %v1124 = vor.u32 %v1122, %v1123
    %v1125 = vshll.u32 2475754826, %v1119
    %v1126 = vshrl.u32 2131351028, %v1120
    %v1127 = vor.u32 %v1125, %v1126
    %v1128 = vshll.u32 2131351028, %v1119
    %v1129 = vshrl.u32 2102212464, %v1120
    %v1130 = vor.u32 %v1128, %v1129
    %v1131 = vshll.u32 2102212464, %v1119
    %v1132 = vshrl.u32 920167782, %v1120
    %v1133 = vor.u32 %v1131, %v1132
    %v1134 = vshll.u32 920167782, %v1119
    %v1135 = vshrl.u32 1326507024, %v1120
    %v1136 = vor.u32 %v1134, %v1135
    %vm1137 = vcmp.lt.s32.totalorder %v1118, 1
    %vm1138 = vcmp.lt.s32.totalorder %v1118, 2
    %vm1139 = vcmp.lt.s32.totalorder %v1118, 3
    %vm1140 = vcmp.lt.s32.totalorder %v1118, 4
    %v1141 = vsel %vm1137, %v1121, %v1124
    %v1142 = vsel %vm1140, %v1130, 2102212464
    %v1143 = vsel %vm1139, %v1127, %v1142
    %v1144 = vsel %vm1138, %v1141, %v1143
    %v1145 = vsel %vm1137, %v1124, %v1127
    %v1146 = vsel %vm1140, %v1133, 920167782
    %v1147 = vsel %vm1139, %v1130, %v1146
    %v1148 = vsel %vm1138, %v1145, %v1147
    %v1149 = vsel %vm1137, %v1127, %v1130
    %v1150 = vsel %vm1140, %v1136, 1326507024
    %v1151 = vsel %vm1139, %v1133, %v1150
    %v1152 = vsel %vm1138, %v1149, %v1151
    %v1153 = vshll.u32 %v1113, 8
    %v1154 = vmul.u32.u64.compose %v1153, %v1152
    %v1155 = vextract.low.u32 %v1154
    %v1156 = vextract.high.u32 %v1154
    %v1157 = vmul.u32.u64.compose %v1153, %v1148
    %v1158 = vextract.low.u32 %v1157
    %v1159 = vextract.high.u32 %v1157
    %v1160 = vmul.u32 %v1153, %v1144
    %v1161 = vadd.s32 %v1156, %v1158
    %vm1162 = vc.u32 %v1156, %v1158
    %v1163 = vadd.s32 %v1159, 1
    %v1164 = vsel %vm1162, %v1163, %v1159
    %v1165 = vadd.s32 %v1160, %v1164
    %v1166 = vadd.s32 %v1165, 536870912
    %v1167 = vshrl.u32 %v1166, 30
    %v1168 = vshll.u32 %v1167, 30
    %v1169 = vsub.s32 %v1165, %v1168
    %vm1170 = vcmp.lt.s32.totalorder %v1169, 0
    %v1171 = vsub.s32 0, %v1169
    %v1172 = vsel %vm1170, %v1171, %v1169
    %v1173 = vclz %v1172
    %v1174 = vsub.s32 %v1173, 2
    %vm1175 = vcmp.gt.s32.totalorder 0, %v1174
    %v1176 = vsel %vm1175, 0, %v1174
    %v1177 = vsub.s32 32, %v1176
    %v1178 = vshll.u32 %v1169, %v1176
    %v1179 = vshrl.u32 %v1161, %v1177
    %v1180 = vor.u32 %v1178, %v1179
    %v1181 = vsub.s32 4294967266, %v1176
    %v1182 = vadd.s32 %v1181, 127
    %v1183 = vshll.u32 %v1182, 23
    %v1184 = vor.u32 4788187, %v1183
    %v1185 = vand.u32 2147483647, %v1184
    %v1187 = vcvt.s32.f32 %v1180
    %v1188 = vmul.f32 %v1187, %v1185
    %v1189 = vxor.u32 %v1188, 2147483648
    %v1190 = vsel %vm1107, %v1189, %v1188
    %v1191 = vsub.s32 4, %v1167
    %v1192 = vsel %vm1107, %v1191, %v1167
    %v1193 = vsel %vm1106, %v263, %v1190
    %v1194 = vsel %vm1106, 0, %v1192
    %v1195 = vcosq.f32.pop %v1193
    %v1196 = vsinq.f32.pop %v1193
    %vm1197 = vweird.f32 %v263
    %v1198 = vadd.s32 %v1194, 3
    %v1199 = vand.u32 %v1198, 3
    %vm1200 = vcmp.lt.s32.totalorder %v1199, 2
    %vm1201 = vcmp.eq.s32.totalorder %v1199, 0
    %v1202 = vxor.u32 %v1196, 2147483648
    %v1203 = vsel %vm1201, %v1195, %v1202
    %vm1204 = vcmp.eq.s32.totalorder %v1199, 2
    %v1205 = vxor.u32 %v1195, 2147483648
    %v1206 = vsel %vm1204, %v1205, %v1196
    %v1207 = vsel %vm1200, %v1203, %v1206
    %v1208 = vsel %vm1197, nan, %v1207
    %v1209 = vand.u32 2147483647, %v264
    %vm1210 = vcmp.le.f32.partialorder %v1209, 0.7853982
    %vm1211 = vcmp.lt.s32.totalorder %v264, 0
    %v1212 = vand.u32 %v264, 2139095040
    %v1213 = vshrl.u32 %v1212, 23
    %v1214 = vsub.s32 %v1213, 127
    %v1215 = vand.u32 2147483647, %v264
    %v1216 = vand.u32 %v1215, 8388607
    %v1217 = vor.u32 %v1216, 8388608
    %v1218 = vsub.s32 0, %v1217
    %v1219 = vadd.s32 %v1214, 1
    %vm1220 = vcmp.gt.s32.totalorder %v1219, 0
    %v1221 = vsel %vm1220, %v1219, 0
    %v1222 = vshrl.u32 %v1221, 5
    %v1223 = vand.u32 %v1221, 31
    %v1224 = vsub.s32 32, %v1223
    %v1225 = vshrl.u32 683565275, %v1224
    %v1226 = vshll.u32 683565275, %v1223
    %v1227 = vshrl.u32 2475754826, %v1224
    %v1228 = vor.u32 %v1226, %v1227
    %v1229 = vshll.u32 2475754826, %v1223
    %v1230 = vshrl.u32 2131351028, %v1224
    %v1231 = vor.u32 %v1229, %v1230
    %v1232 = vshll.u32 2131351028, %v1223
    %v1233 = vshrl.u32 2102212464, %v1224
    %v1234 = vor.u32 %v1232, %v1233
    %v1235 = vshll.u32 2102212464, %v1223
    %v1236 = vshrl.u32 920167782, %v1224
    %v1237 = vor.u32 %v1235, %v1236
    %v1238 = vshll.u32 920167782, %v1223
    %v1239 = vshrl.u32 1326507024, %v1224
    %v1240 = vor.u32 %v1238, %v1239
    %vm1241 = vcmp.lt.s32.totalorder %v1222, 1
    %vm1242 = vcmp.lt.s32.totalorder %v1222, 2
    %vm1243 = vcmp.lt.s32.totalorder %v1222, 3
    %vm1244 = vcmp.lt.s32.totalorder %v1222, 4
    %v1245 = vsel %vm1241, %v1225, %v1228
    %v1246 = vsel %vm1244, %v1234, 2102212464
    %v1247 = vsel %vm1243, %v1231, %v1246
    %v1248 = vsel %vm1242, %v1245, %v1247
    %v1249 = vsel %vm1241, %v1228, %v1231
    %v1250 = vsel %vm1244, %v1237, 920167782
    %v1251 = vsel %vm1243, %v1234, %v1250
    %v1252 = vsel %vm1242, %v1249, %v1251
    %v1253 = vsel %vm1241, %v1231, %v1234
    %v1254 = vsel %vm1244, %v1240, 1326507024
    %v1255 = vsel %vm1243, %v1237, %v1254
    %v1256 = vsel %vm1242, %v1253, %v1255
    %v1257 = vshll.u32 %v1217, 8
    %v1258 = vmul.u32.u64.compose %v1257, %v1256
    %v1259 = vextract.low.u32 %v1258
    %v1260 = vextract.high.u32 %v1258
    %v1261 = vmul.u32.u64.compose %v1257, %v1252
    %v1262 = vextract.low.u32 %v1261
    %v1263 = vextract.high.u32 %v1261
    %v1264 = vmul.u32 %v1257, %v1248
    %v1265 = vadd.s32 %v1260, %v1262
    %vm1266 = vc.u32 %v1260, %v1262
    %v1267 = vadd.s32 %v1263, 1
    %v1268 = vsel %vm1266, %v1267, %v1263
    %v1269 = vadd.s32 %v1264, %v1268
    %v1270 = vadd.s32 %v1269, 536870912
    %v1271 = vshrl.u32 %v1270, 30
    %v1272 = vshll.u32 %v1271, 30
    %v1273 = vsub.s32 %v1269, %v1272
    %vm1274 = vcmp.lt.s32.totalorder %v1273, 0
    %v1275 = vsub.s32 0, %v1273
    %v1276 = vsel %vm1274, %v1275, %v1273
    %v1277 = vclz %v1276
    %v1278 = vsub.s32 %v1277, 2
    %vm1279 = vcmp.gt.s32.totalorder 0, %v1278
    %v1280 = vsel %vm1279, 0, %v1278
    %v1281 = vsub.s32 32, %v1280
    %v1282 = vshll.u32 %v1273, %v1280
    %v1283 = vshrl.u32 %v1265, %v1281
    %v1284 = vor.u32 %v1282, %v1283
    %v1285 = vsub.s32 4294967266, %v1280
    %v1286 = vadd.s32 %v1285, 127
    %v1287 = vshll.u32 %v1286, 23
    %v1288 = vor.u32 4788187, %v1287
    %v1289 = vand.u32 2147483647, %v1288
    %v1291 = vcvt.s32.f32 %v1284
    %v1292 = vmul.f32 %v1291, %v1289
    %v1293 = vxor.u32 %v1292, 2147483648
    %v1294 = vsel %vm1211, %v1293, %v1292
    %v1295 = vsub.s32 4, %v1271
    %v1296 = vsel %vm1211, %v1295, %v1271
    %v1297 = vsel %vm1210, %v264, %v1294
    %v1298 = vsel %vm1210, 0, %v1296
    %v1299 = vcosq.f32.pop %v1297
    %v1300 = vsinq.f32.pop %v1297
    %vm1301 = vweird.f32 %v264
    %v1302 = vadd.s32 %v1298, 3
    %v1303 = vand.u32 %v1302, 3
    %vm1304 = vcmp.lt.s32.totalorder %v1303, 2
    %vm1305 = vcmp.eq.s32.totalorder %v1303, 0
    %v1306 = vxor.u32 %v1300, 2147483648
    %v1307 = vsel %vm1305, %v1299, %v1306
    %vm1308 = vcmp.eq.s32.totalorder %v1303, 2
    %v1309 = vxor.u32 %v1299, 2147483648
    %v1310 = vsel %vm1308, %v1309, %v1300
    %v1311 = vsel %vm1304, %v1307, %v1310
    %v1312 = vsel %vm1301, nan, %v1311
    %v1313 = vand.u32 2147483647, %v265
    %vm1314 = vcmp.le.f32.partialorder %v1313, 0.7853982
    %vm1315 = vcmp.lt.s32.totalorder %v265, 0
    %v1316 = vand.u32 %v265, 2139095040
    %v1317 = vshrl.u32 %v1316, 23
    %v1318 = vsub.s32 %v1317, 127
    %v1319 = vand.u32 2147483647, %v265
    %v1320 = vand.u32 %v1319, 8388607
    %v1321 = vor.u32 %v1320, 8388608
    %v1322 = vsub.s32 0, %v1321
    %v1323 = vadd.s32 %v1318, 1
    %vm1324 = vcmp.gt.s32.totalorder %v1323, 0
    %v1325 = vsel %vm1324, %v1323, 0
    %v1326 = vshrl.u32 %v1325, 5
    %v1327 = vand.u32 %v1325, 31
    %v1328 = vsub.s32 32, %v1327
    %v1329 = vshrl.u32 683565275, %v1328
    %v1330 = vshll.u32 683565275, %v1327
    %v1331 = vshrl.u32 2475754826, %v1328
    %v1332 = vor.u32 %v1330, %v1331
    %v1333 = vshll.u32 2475754826, %v1327
    %v1334 = vshrl.u32 2131351028, %v1328
    %v1335 = vor.u32 %v1333, %v1334
    %v1336 = vshll.u32 2131351028, %v1327
    %v1337 = vshrl.u32 2102212464, %v1328
    %v1338 = vor.u32 %v1336, %v1337
    %v1339 = vshll.u32 2102212464, %v1327
    %v1340 = vshrl.u32 920167782, %v1328
    %v1341 = vor.u32 %v1339, %v1340
    %v1342 = vshll.u32 920167782, %v1327
    %v1343 = vshrl.u32 1326507024, %v1328
    %v1344 = vor.u32 %v1342, %v1343
    %vm1345 = vcmp.lt.s32.totalorder %v1326, 1
    %vm1346 = vcmp.lt.s32.totalorder %v1326, 2
    %vm1347 = vcmp.lt.s32.totalorder %v1326, 3
    %vm1348 = vcmp.lt.s32.totalorder %v1326, 4
    %v1349 = vsel %vm1345, %v1329, %v1332
    %v1350 = vsel %vm1348, %v1338, 2102212464
    %v1351 = vsel %vm1347, %v1335, %v1350
    %v1352 = vsel %vm1346, %v1349, %v1351
    %v1353 = vsel %vm1345, %v1332, %v1335
    %v1354 = vsel %vm1348, %v1341, 920167782
    %v1355 = vsel %vm1347, %v1338, %v1354
    %v1356 = vsel %vm1346, %v1353, %v1355
    %v1357 = vsel %vm1345, %v1335, %v1338
    %v1358 = vsel %vm1348, %v1344, 1326507024
    %v1359 = vsel %vm1347, %v1341, %v1358
    %v1360 = vsel %vm1346, %v1357, %v1359
    %v1361 = vshll.u32 %v1321, 8
    %v1362 = vmul.u32.u64.compose %v1361, %v1360
    %v1363 = vextract.low.u32 %v1362
    %v1364 = vextract.high.u32 %v1362
    %v1365 = vmul.u32.u64.compose %v1361, %v1356
    %v1366 = vextract.low.u32 %v1365
    %v1367 = vextract.high.u32 %v1365
    %v1368 = vmul.u32 %v1361, %v1352
    %v1369 = vadd.s32 %v1364, %v1366
    %vm1370 = vc.u32 %v1364, %v1366
    %v1371 = vadd.s32 %v1367, 1
    %v1372 = vsel %vm1370, %v1371, %v1367
    %v1373 = vadd.s32 %v1368, %v1372
    %v1374 = vadd.s32 %v1373, 536870912
    %v1375 = vshrl.u32 %v1374, 30
    %v1376 = vshll.u32 %v1375, 30
    %v1377 = vsub.s32 %v1373, %v1376
    %vm1378 = vcmp.lt.s32.totalorder %v1377, 0
    %v1379 = vsub.s32 0, %v1377
    %v1380 = vsel %vm1378, %v1379, %v1377
    %v1381 = vclz %v1380
    %v1382 = vsub.s32 %v1381, 2
    %vm1383 = vcmp.gt.s32.totalorder 0, %v1382
    %v1384 = vsel %vm1383, 0, %v1382
    %v1385 = vsub.s32 32, %v1384
    %v1386 = vshll.u32 %v1377, %v1384
    %v1387 = vshrl.u32 %v1369, %v1385
    %v1388 = vor.u32 %v1386, %v1387
    %v1389 = vsub.s32 4294967266, %v1384
    %v1390 = vadd.s32 %v1389, 127
    %v1391 = vshll.u32 %v1390, 23
    %v1392 = vor.u32 4788187, %v1391
    %v1393 = vand.u32 2147483647, %v1392
    %v1395 = vcvt.s32.f32 %v1388
    %v1396 = vmul.f32 %v1395, %v1393
    %v1397 = vxor.u32 %v1396, 2147483648
    %v1398 = vsel %vm1315, %v1397, %v1396
    %v1399 = vsub.s32 4, %v1375
    %v1400 = vsel %vm1315, %v1399, %v1375
    %v1401 = vsel %vm1314, %v265, %v1398
    %v1402 = vsel %vm1314, 0, %v1400
    %v1403 = vcosq.f32.pop %v1401
    %v1404 = vsinq.f32.pop %v1401
    %vm1405 = vweird.f32 %v265
    %v1406 = vadd.s32 %v1402, 3
    %v1407 = vand.u32 %v1406, 3
    %vm1408 = vcmp.lt.s32.totalorder %v1407, 2
    %vm1409 = vcmp.eq.s32.totalorder %v1407, 0
    %v1410 = vxor.u32 %v1404, 2147483648
    %v1411 = vsel %vm1409, %v1403, %v1410
    %vm1412 = vcmp.eq.s32.totalorder %v1407, 2
    %v1413 = vxor.u32 %v1403, 2147483648
    %v1414 = vsel %vm1412, %v1413, %v1404
    %v1415 = vsel %vm1408, %v1411, %v1414
    %v1416 = vsel %vm1405, nan, %v1415
    %v1417 = vand.u32 2147483647, %v266
    %vm1418 = vcmp.le.f32.partialorder %v1417, 0.7853982
    %vm1419 = vcmp.lt.s32.totalorder %v266, 0
    %v1420 = vand.u32 %v266, 2139095040
    %v1421 = vshrl.u32 %v1420, 23
    %v1422 = vsub.s32 %v1421, 127
    %v1423 = vand.u32 2147483647, %v266
    %v1424 = vand.u32 %v1423, 8388607
    %v1425 = vor.u32 %v1424, 8388608
    %v1426 = vsub.s32 0, %v1425
    %v1427 = vadd.s32 %v1422, 1
    %vm1428 = vcmp.gt.s32.totalorder %v1427, 0
    %v1429 = vsel %vm1428, %v1427, 0
    %v1430 = vshrl.u32 %v1429, 5
    %v1431 = vand.u32 %v1429, 31
    %v1432 = vsub.s32 32, %v1431
    %v1433 = vshrl.u32 683565275, %v1432
    %v1434 = vshll.u32 683565275, %v1431
    %v1435 = vshrl.u32 2475754826, %v1432
    %v1436 = vor.u32 %v1434, %v1435
    %v1437 = vshll.u32 2475754826, %v1431
    %v1438 = vshrl.u32 2131351028, %v1432
    %v1439 = vor.u32 %v1437, %v1438
    %v1440 = vshll.u32 2131351028, %v1431
    %v1441 = vshrl.u32 2102212464, %v1432
    %v1442 = vor.u32 %v1440, %v1441
    %v1443 = vshll.u32 2102212464, %v1431
    %v1444 = vshrl.u32 920167782, %v1432
    %v1445 = vor.u32 %v1443, %v1444
    %v1446 = vshll.u32 920167782, %v1431
    %v1447 = vshrl.u32 1326507024, %v1432
    %v1448 = vor.u32 %v1446, %v1447
    %vm1449 = vcmp.lt.s32.totalorder %v1430, 1
    %vm1450 = vcmp.lt.s32.totalorder %v1430, 2
    %vm1451 = vcmp.lt.s32.totalorder %v1430, 3
    %vm1452 = vcmp.lt.s32.totalorder %v1430, 4
    %v1453 = vsel %vm1449, %v1433, %v1436
    %v1454 = vsel %vm1452, %v1442, 2102212464
    %v1455 = vsel %vm1451, %v1439, %v1454
    %v1456 = vsel %vm1450, %v1453, %v1455
    %v1457 = vsel %vm1449, %v1436, %v1439
    %v1458 = vsel %vm1452, %v1445, 920167782
    %v1459 = vsel %vm1451, %v1442, %v1458
    %v1460 = vsel %vm1450, %v1457, %v1459
    %v1461 = vsel %vm1449, %v1439, %v1442
    %v1462 = vsel %vm1452, %v1448, 1326507024
    %v1463 = vsel %vm1451, %v1445, %v1462
    %v1464 = vsel %vm1450, %v1461, %v1463
    %v1465 = vshll.u32 %v1425, 8
    %v1466 = vmul.u32.u64.compose %v1465, %v1464
    %v1467 = vextract.low.u32 %v1466
    %v1468 = vextract.high.u32 %v1466
    %v1469 = vmul.u32.u64.compose %v1465, %v1460
    %v1470 = vextract.low.u32 %v1469
    %v1471 = vextract.high.u32 %v1469
    %v1472 = vmul.u32 %v1465, %v1456
    %v1473 = vadd.s32 %v1468, %v1470
    %vm1474 = vc.u32 %v1468, %v1470
    %v1475 = vadd.s32 %v1471, 1
    %v1476 = vsel %vm1474, %v1475, %v1471
    %v1477 = vadd.s32 %v1472, %v1476
    %v1478 = vadd.s32 %v1477, 536870912
    %v1479 = vshrl.u32 %v1478, 30
    %v1480 = vshll.u32 %v1479, 30
    %v1481 = vsub.s32 %v1477, %v1480
    %vm1482 = vcmp.lt.s32.totalorder %v1481, 0
    %v1483 = vsub.s32 0, %v1481
    %v1484 = vsel %vm1482, %v1483, %v1481
    %v1485 = vclz %v1484
    %v1486 = vsub.s32 %v1485, 2
    %vm1487 = vcmp.gt.s32.totalorder 0, %v1486
    %v1488 = vsel %vm1487, 0, %v1486
    %v1489 = vsub.s32 32, %v1488
    %v1490 = vshll.u32 %v1481, %v1488
    %v1491 = vshrl.u32 %v1473, %v1489
    %v1492 = vor.u32 %v1490, %v1491
    %v1493 = vsub.s32 4294967266, %v1488
    %v1494 = vadd.s32 %v1493, 127
    %v1495 = vshll.u32 %v1494, 23
    %v1496 = vor.u32 4788187, %v1495
    %v1497 = vand.u32 2147483647, %v1496
    %v1499 = vcvt.s32.f32 %v1492
    %v1500 = vmul.f32 %v1499, %v1497
    %v1501 = vxor.u32 %v1500, 2147483648
    %v1502 = vsel %vm1419, %v1501, %v1500
    %v1503 = vsub.s32 4, %v1479
    %v1504 = vsel %vm1419, %v1503, %v1479
    %v1505 = vsel %vm1418, %v266, %v1502
    %v1506 = vsel %vm1418, 0, %v1504
    %v1507 = vcosq.f32.pop %v1505
    %v1508 = vsinq.f32.pop %v1505
    %vm1509 = vweird.f32 %v266
    %v1510 = vadd.s32 %v1506, 3
    %v1511 = vand.u32 %v1510, 3
    %vm1512 = vcmp.lt.s32.totalorder %v1511, 2
    %vm1513 = vcmp.eq.s32.totalorder %v1511, 0
    %v1514 = vxor.u32 %v1508, 2147483648
    %v1515 = vsel %vm1513, %v1507, %v1514
    %vm1516 = vcmp.eq.s32.totalorder %v1511, 2
    %v1517 = vxor.u32 %v1507, 2147483648
    %v1518 = vsel %vm1516, %v1517, %v1508
    %v1519 = vsel %vm1512, %v1515, %v1518
    %v1520 = vsel %vm1509, nan, %v1519
    %v1521 = vmul.f32 %v225, %v1000
    %v1522 = vmul.f32 %v232, %v1104
    %v1523 = vmul.f32 %v239, %v1208
    %v1524 = vmul.f32 %v246, %v1312
    %v1525 = vmul.f32 %v253, %v1416
    %v1526 = vmul.f32 %v260, %v1520
    %1527 = vst [vmem:[#allocation3 + $0x30] sm:$0xff] %v1521
    %1528 = vst [vmem:[#allocation3 + $0x38] sm:$0xff] %v1522
    %1529 = vst [vmem:[#allocation3 + $0x40] sm:$0xff] %v1523
    %1530 = vst [vmem:[#allocation3 + $0x48] sm:$0xff] %v1524
    %1531 = vst [vmem:[#allocation3 + $0x50] sm:$0xff] %v1525
    %1532 = vst [vmem:[#allocation3 + $0x58] sm:$0xff] %v1526
    // Predicated region
    $region6: #{_packed_slab.1} parent=1 // pred_check
      _
    $region7: #{_packed_slab.1} parent=1 // pred_check_branch
      %1534 = sbr.rel (0) target = $region9
    $region8: #{_packed_slab.1} parent=1 // pred_region
      %s1536 = ssub.s32 1536, 1536
      %1537 = vsyncadd [#allocation4], %s1536
      %s1538 = sshll.u32 [#allocation3], 4
      %s1539 = int_to_ptr.vmem [resolvable:$true] %s1538
      %1544 = dma.vmem_to_hbm [thread:$0]  %s1539, 1536, %s1, [#allocation4], 128, 128, 8
    $region9: #{_packed_slab.1} parent=1 // pred_fallthru
      _
    // Predicated region
    $region10: #{_packed_slab.1} parent=1 // pred_check
      _
    $region11: #{_packed_slab.1} parent=1 // pred_check_branch
      %1546 = sbr.rel (0) target = $region13
    $region12: #{_packed_slab.1} parent=1 // pred_region
      %1547 = dma.done [#allocation4], 1536
    $region13: #{_packed_slab.1} parent=1 // pred_fallthru
      _
    %1548 = vsyncpa [#allocation4], 1

</llo_original>
